<compile_context>
chip_gen: v5e
topology: v5e:2x2
jax: 0.10.0
libtpu: 0.0.40
codegen_flags: <defaults>
</compile_context>

<pallas_src>
import math
import functools

import jax
import jax.numpy as jnp
from jax.experimental import pallas as pl
from jax.experimental.pallas import tpu as pltpu


# ---------------------------------------------------------------------------
# small math helpers (identical forms used in kernel and reference)
# ---------------------------------------------------------------------------
_LN_EPS = 1e-5  # PyTorch nn.LayerNorm default


def _layernorm(x, g, b):
    mean = jnp.mean(x, axis=-1, keepdims=True)
    xc = x - mean
    var = jnp.mean(xc * xc, axis=-1, keepdims=True)
    return xc * jax.lax.rsqrt(var + _LN_EPS) * g + b


def _gelu_tanh(x):
    c = math.sqrt(2.0 / math.pi)
    return 0.5 * x * (1.0 + jnp.tanh(c * (x + 0.044715 * x * x * x)))


# ---------------------------------------------------------------------------
# Pallas kernel: grid = (batch_tiles, depth)
#   one batch tile of BT sequences / one transformer block per grid step;
#   activation (BT*S, D) carried in VMEM scratch across the depth axis.
# ---------------------------------------------------------------------------
def vit_decoder_kernel(x_ref,
                       ln1_g_ref, ln1_b_ref, w_qkv_ref,
                       w_proj_ref, b_proj_ref,
                       ln2_g_ref, ln2_b_ref,
                       w_fc1_ref, b_fc1_ref, w_fc2_ref, b_fc2_ref,
                       norm_g_ref, norm_b_ref, w_head_ref, b_head_ref,
                       out_ref,
                       h_ref, attn_ref,
                       *, num_heads, return_token_num):
    d = pl.program_id(1)
    depth = pl.num_programs(1)

    BT, S, D = x_ref.shape
    M = BT * S
    hd = D // num_heads
    scale = hd ** -0.5
    bf16 = jnp.bfloat16

    # load the input activation into the resident VMEM buffer at block 0
    @pl.when(d == 0)
    def _():
        h_ref[...] = x_ref[...].reshape(M, D).astype(jnp.float32)

    h = h_ref[...]                                            # (M, D) f32

    # ---------------- Attention: x = x + proj(MHSA(LN1(x))) ----------------
    xn1 = _layernorm(h, ln1_g_ref[0], ln1_b_ref[0])
    # fused qkv projection (no bias: qkv_bias=False), bf16 operands / f32 accum
    qkv = jnp.dot(xn1.astype(bf16), w_qkv_ref[0],
                  preferred_element_type=jnp.float32)         # (M, 3D) f32
    qkv = qkv.reshape(BT, S, 3 * D)

    # per-head BT-batched attention; head outputs gathered into attn_ref so the
    # output projection is one full-K matmul afterwards.
    for hh in range(num_heads):
        q = (qkv[:, :, hh * hd:(hh + 1) * hd] * scale).astype(bf16)
        k = qkv[:, :, D + hh * hd:D + (hh + 1) * hd].astype(bf16)
        v = qkv[:, :, 2 * D + hh * hd:2 * D + (hh + 1) * hd].astype(bf16)
        s = jnp.einsum('bqd,bkd->bqk', q, k,
                       preferred_element_type=jnp.float32)    # (BT, S, S) f32
        s = s - jnp.max(s, axis=-1, keepdims=True)
        e = jnp.exp(s)
        p = e * pl.reciprocal(jnp.sum(e, axis=-1, keepdims=True), approx=True)
        o = jnp.einsum('bqk,bkd->bqd', p.astype(bf16), v,
                       preferred_element_type=jnp.float32)    # (BT, S, hd)
        attn_ref[:, hh * hd:(hh + 1) * hd] = o.reshape(M, hd).astype(bf16)

    # single (M, D) @ (D, D) output projection
    attn = jnp.dot(attn_ref[...], w_proj_ref[0],
                   preferred_element_type=jnp.float32)
    h1 = h + attn + b_proj_ref[0]

    # ---------------- MLP: x = x + fc2(gelu(fc1(LN2(x)))) ------------------
    xn2 = _layernorm(h1, ln2_g_ref[0], ln2_b_ref[0])
    y = jnp.dot(xn2.astype(bf16), w_fc1_ref[0],
                preferred_element_type=jnp.float32) + b_fc1_ref[0]
    y = _gelu_tanh(y)
    y = jnp.dot(y.astype(bf16), w_fc2_ref[0],
                preferred_element_type=jnp.float32) + b_fc2_ref[0]
    h2 = h1 + y

    h_ref[...] = h2

    # ---------------- final norm + head on the last T tokens ---------------
    @pl.when(d == depth - 1)
    def _():
        t = return_token_num if return_token_num > 0 else S
        ht = h2.reshape(BT, S, D)[:, S - t:, :].reshape(BT * t, D)  # static slice
        hn = _layernorm(ht, norm_g_ref[...], norm_b_ref[...])
        out = (jnp.dot(hn.astype(bf16), w_head_ref[...],
                       preferred_element_type=jnp.float32) + b_head_ref[...])
        C = out.shape[-1]
        out_ref[...] = out.reshape(BT, t, C).astype(out_ref.dtype)  # dense store


# ---------------------------------------------------------------------------
# wrapper
# ---------------------------------------------------------------------------
_STACKED = ["ln1_g", "ln1_b", "w_qkv", "w_proj", "b_proj",
            "ln2_g", "ln2_b", "w_fc1", "b_fc1", "w_fc2", "b_fc2"]
_CONST = ["norm_g", "norm_b", "w_head", "b_head"]
_MATMUL_W = {"w_qkv", "w_proj", "w_fc1", "w_fc2", "w_head"}


def _default_batch_tile(B):
    # largest divisor of B that keeps >= 2 blocks on the parallel axis (megacore)
    if B <= 1:
        return 1
    for bt in range(max(1, B // 2), 0, -1):
        if B % bt == 0:
            return bt
    return 1


def vit_decoder_forward(x, params, *, num_heads, return_token_num,
                        batch_tile=None,
                        vmem_limit_bytes=48 * 1024 * 1024):
    B, S, D = x.shape
    depth = params["w_qkv"].shape[0]
    C = params["w_head"].shape[-1]
    T = return_token_num if return_token_num > 0 else S

    BT = _default_batch_tile(B) if batch_tile is None else batch_tile
    assert B % BT == 0, (B, BT)

    def maybe_bf16(name, p):
        return p.astype(jnp.bfloat16) if name in _MATMUL_W else p

    def stacked_spec(p):
        shp = p.shape                      # (depth, ...)
        return pl.BlockSpec((1,) + shp[1:],
                            lambda b, d, _n=len(shp): (d,) + (0,) * (_n - 1))

    def const_spec(p):
        shp = p.shape
        return pl.BlockSpec(shp, lambda b, d, _n=len(shp): (0,) * _n)

    in_specs = ([pl.BlockSpec((BT, S, D), lambda b, d: (b, 0, 0))]
                + [stacked_spec(params[n]) for n in _STACKED]
                + [const_spec(params[n]) for n in _CONST])

    kernel = functools.partial(vit_decoder_kernel,
                               num_heads=num_heads,
                               return_token_num=return_token_num)

    operands = ([x]
                + [maybe_bf16(n, params[n]) for n in _STACKED]
                + [maybe_bf16(n, params[n]) for n in _CONST])

    return pl.pallas_call(
        kernel,
        out_shape=jax.ShapeDtypeStruct((B, T, C), x.dtype),
        grid_spec=pltpu.PrefetchScalarGridSpec(
            num_scalar_prefetch=0,
            grid=(B // BT, depth),
            in_specs=in_specs,
            out_specs=pl.BlockSpec((BT, T, C), lambda b, d: (b, 0, 0)),
            scratch_shapes=[pltpu.VMEM((BT * S, D), jnp.float32),   # residual
                            pltpu.VMEM((BT * S, D), jnp.bfloat16)], # head outs
        ),
        compiler_params=pltpu.CompilerParams(
            dimension_semantics=("parallel", "arbitrary"),
            vmem_limit_bytes=vmem_limit_bytes),
    )(*operands)


# ---------------------------------------------------------------------------
# deterministic parameter construction (stacked over depth, (in, out) layout)
# matmul weights stored bf16 in HBM (halves weight DMA bytes; f32 accumulation)
# ---------------------------------------------------------------------------
def init_params(key, depth, dim, mlp_ratio, num_classes):
    hidden = int(dim * mlp_ratio)
    keys = list(jax.random.split(key, depth * 11 + 4))
    it = iter(keys)

    def xavier(k, fan_in, fan_out):
        a = math.sqrt(6.0 / (fan_in + fan_out))
        return jax.random.uniform(k, (fan_in, fan_out), jnp.float32, -a, a)

    def small(k, shape):
        return 0.1 * jax.random.normal(k, shape, jnp.float32)

    cols = {n: [] for n in _STACKED}
    for _ in range(depth):
        cols["ln1_g"].append(1.0 + small(next(it), (1, dim)))
        cols["ln1_b"].append(small(next(it), (1, dim)))
        cols["w_qkv"].append(xavier(next(it), dim, 3 * dim))
        cols["w_proj"].append(xavier(next(it), dim, dim))
        cols["b_proj"].append(small(next(it), (1, dim)))
        cols["ln2_g"].append(1.0 + small(next(it), (1, dim)))
        cols["ln2_b"].append(small(next(it), (1, dim)))
        cols["w_fc1"].append(xavier(next(it), dim, hidden))
        cols["b_fc1"].append(small(next(it), (1, hidden)))
        cols["w_fc2"].append(xavier(next(it), hidden, dim))
        cols["b_fc2"].append(small(next(it), (1, dim)))

    params = {n: jnp.stack(v, axis=0) for n, v in cols.items()}
    params["norm_g"] = 1.0 + small(next(it), (1, dim))
    params["norm_b"] = small(next(it), (1, dim))
    params["w_head"] = xavier(next(it), dim, num_classes)
    params["b_head"] = small(next(it), (1, num_classes))

    for n in _MATMUL_W:
        params[n] = params[n].astype(jnp.bfloat16)
    return params


# ---------------------------------------------------------------------------
# pure-JAX reference mirroring the kernel numerics (bf16 matmul operands,
# f32 accumulation, tanh GELU) for a tight sanity check.
# ---------------------------------------------------------------------------
def reference_forward(x, p, *, num_heads, return_token_num):
    B, S, D = x.shape
    depth = p["w_qkv"].shape[0]
    hd = D // num_heads
    scale = hd ** -0.5
    bf16 = jnp.bfloat16

    def mm(a, b):
        return jnp.einsum('...k,kn->...n', a.astype(bf16), b.astype(bf16),
                          preferred_element_type=jnp.float32)

    h = x.astype(jnp.float32)
    for d in range(depth):
        xn = _layernorm(h, p["ln1_g"][d], p["ln1_b"][d])
        qkv = mm(xn, p["w_qkv"][d])
        q, k, v = jnp.split(qkv, 3, axis=-1)
        q = q.reshape(B, S, num_heads, hd).transpose(0, 2, 1, 3) * scale
        k = k.reshape(B, S, num_heads, hd).transpose(0, 2, 1, 3)
        v = v.reshape(B, S, num_heads, hd).transpose(0, 2, 1, 3)
        s = jnp.einsum('bhqd,bhkd->bhqk', q.astype(bf16), k.astype(bf16),
                       preferred_element_type=jnp.float32)
        att = jax.nn.softmax(s, axis=-1)
        o = jnp.einsum('bhqk,bhkd->bhqd', att.astype(bf16), v.astype(bf16),
                       preferred_element_type=jnp.float32)
        o = o.transpose(0, 2, 1, 3).reshape(B, S, D)
        h = h + mm(o, p["w_proj"][d]) + p["b_proj"][d]
        xn2 = _layernorm(h, p["ln2_g"][d], p["ln2_b"][d])
        y = _gelu_tanh(mm(xn2, p["w_fc1"][d]) + p["b_fc1"][d])
        h = h + mm(y, p["w_fc2"][d]) + p["b_fc2"][d]

    t = return_token_num if return_token_num > 0 else S
    ht = h[:, S - t:, :]
    hn = _layernorm(ht, p["norm_g"], p["norm_b"])
    return mm(hn, p["w_head"]) + p["b_head"]


# ---------------------------------------------------------------------------
if __name__ == "__main__":
    # small shapes consistent with the module: (B, num_patches, embed_dim)
    # S multiple of 8, return_token_num multiple of 8, num_classes = 128
    # (lane-dense output store).
    B, S, D = 4, 16, 32
    depth, num_heads, mlp_ratio, num_classes = 2, 4, 4.0, 128
    return_token_num = 8

    key = jax.random.PRNGKey(0)
    kx, kp = jax.random.split(key)
    x = jax.random.normal(kx, (B, S, D), jnp.float32)
    params = init_params(kp, depth, D, mlp_ratio, num_classes)

    fwd = jax.jit(functools.partial(vit_decoder_forward,
                                    num_heads=num_heads,
                                    return_token_num=return_token_num))
    out = fwd(x, params)
    jax.block_until_ready(out)

    ref = reference_forward(x, params, num_heads=num_heads,
                            return_token_num=return_token_num)
    err = float(jnp.max(jnp.abs(out - ref)))
    assert out.shape == (B, return_token_num, num_classes), out.shape
    assert err < 2e-2, f"mismatch vs reference: {err}"

    print("KERNEL_OK")
</pallas_src>

<mosaic_0001>
module attributes {stable_mosaic.version = 11 : i64} {
  func.func @vit_decoder_kernel(%arg0: i32, %arg1: i32, %arg2: memref<2x16x32xf32, #tpu.memory_space<vmem>>, %arg3: memref<1x1x32xf32, #tpu.memory_space<vmem>>, %arg4: memref<1x1x32xf32, #tpu.memory_space<vmem>>, %arg5: memref<1x32x96xbf16, #tpu.memory_space<vmem>>, %arg6: memref<1x32x32xbf16, #tpu.memory_space<vmem>>, %arg7: memref<1x1x32xf32, #tpu.memory_space<vmem>>, %arg8: memref<1x1x32xf32, #tpu.memory_space<vmem>>, %arg9: memref<1x1x32xf32, #tpu.memory_space<vmem>>, %arg10: memref<1x32x128xbf16, #tpu.memory_space<vmem>>, %arg11: memref<1x1x128xf32, #tpu.memory_space<vmem>>, %arg12: memref<1x128x32xbf16, #tpu.memory_space<vmem>>, %arg13: memref<1x1x32xf32, #tpu.memory_space<vmem>>, %arg14: memref<1x32xf32, #tpu.memory_space<vmem>>, %arg15: memref<1x32xf32, #tpu.memory_space<vmem>>, %arg16: memref<32x128xbf16, #tpu.memory_space<vmem>>, %arg17: memref<1x128xf32, #tpu.memory_space<vmem>>, %arg18: memref<2x8x128xf32, #tpu.memory_space<vmem>>, %arg19: memref<32x32xf32, #tpu.memory_space<vmem>>, %arg20: memref<32x32xbf16, #tpu.memory_space<vmem>>) attributes {dimension_semantics = [#tpu.dimension_semantics<parallel>, #tpu.dimension_semantics<arbitrary>], iteration_bounds = array<i64: 2, 2>, scalar_prefetch = 0 : i64, scratch_operands = 2 : i64, tpu.core_type = #tpu.core_type<tc>, window_params = [{transform_indices = @transform_0, window_bounds = array<i64: 2, 16, 32>}, {transform_indices = @transform_1, window_bounds = array<i64: 1, 1, 32>}, {transform_indices = @transform_2, window_bounds = array<i64: 1, 1, 32>}, {transform_indices = @transform_3, window_bounds = array<i64: 1, 32, 96>}, {transform_indices = @transform_4, window_bounds = array<i64: 1, 32, 32>}, {transform_indices = @transform_5, window_bounds = array<i64: 1, 1, 32>}, {transform_indices = @transform_6, window_bounds = array<i64: 1, 1, 32>}, {transform_indices = @transform_7, window_bounds = array<i64: 1, 1, 32>}, {transform_indices = @transform_8, window_bounds = array<i64: 1, 32, 128>}, {transform_indices = @transform_9, window_bounds = array<i64: 1, 1, 128>}, {transform_indices = @transform_10, window_bounds = array<i64: 1, 128, 32>}, {transform_indices = @transform_11, window_bounds = array<i64: 1, 1, 32>}, {pipeline_mode = #tpu.pipeline_mode<synchronous>, transform_indices = @transform_12, window_bounds = array<i64: 1, 32>}, {pipeline_mode = #tpu.pipeline_mode<synchronous>, transform_indices = @transform_13, window_bounds = array<i64: 1, 32>}, {pipeline_mode = #tpu.pipeline_mode<synchronous>, transform_indices = @transform_14, window_bounds = array<i64: 32, 128>}, {pipeline_mode = #tpu.pipeline_mode<synchronous>, transform_indices = @transform_15, window_bounds = array<i64: 1, 128>}, {transform_indices = @transform_16, window_bounds = array<i64: 2, 8, 128>}]} {
    %c0_i32 = arith.constant 0 : i32
    %0 = arith.cmpi eq, %arg1, %c0_i32 : i32
    %1 = arith.extui %0 : i1 to i32
    %c0_i32_0 = arith.constant 0 : i32
    %2 = arith.cmpi ne, %1, %c0_i32_0 : i32
    scf.if %2 {
      %c0_82 = arith.constant 0 : index
      %c0_83 = arith.constant 0 : index
      %c0_84 = arith.constant 0 : index
      %196 = vector.load %arg2[%c0_82, %c0_83, %c0_84] : memref<2x16x32xf32, #tpu.memory_space<vmem>>, vector<2x16x32xf32>
      %197 = vector.shape_cast %196 : vector<2x16x32xf32> to vector<32x32xf32>
      %c0_85 = arith.constant 0 : index
      %c0_86 = arith.constant 0 : index
      %198 = vector.load %arg19[%c0_85, %c0_86] : memref<32x32xf32, #tpu.memory_space<vmem>>, vector<32x32xf32>
      tpu.vector_store %arg19[%c0_85, %c0_86], %197 {strides = array<i32>} : memref<32x32xf32, #tpu.memory_space<vmem>>, vector<32x32xf32>,
    } else {
    }
    %c0 = arith.constant 0 : index
    %c0_1 = arith.constant 0 : index
    %3 = vector.load %arg19[%c0, %c0_1] : memref<32x32xf32, #tpu.memory_space<vmem>>, vector<32x32xf32>
    %c0_2 = arith.constant 0 : index
    %c0_3 = arith.constant 0 : index
    %c0_4 = arith.constant 0 : index
    %4 = vector.load %arg3[%c0_2, %c0_3, %c0_4] : memref<1x1x32xf32, #tpu.memory_space<vmem>>, vector<1x1x32xf32>
    %5 = vector.shape_cast %4 : vector<1x1x32xf32> to vector<1x32xf32>
    %c0_5 = arith.constant 0 : index
    %c0_6 = arith.constant 0 : index
    %c0_7 = arith.constant 0 : index
    %6 = vector.load %arg4[%c0_5, %c0_6, %c0_7] : memref<1x1x32xf32, #tpu.memory_space<vmem>>, vector<1x1x32xf32>
    %7 = vector.shape_cast %6 : vector<1x1x32xf32> to vector<1x32xf32>
    %cst = arith.constant dense<0.000000e+00> : vector<32xf32>
    %8 = vector.multi_reduction <add>, %3, %cst [1] : vector<32x32xf32> to vector<32xf32>
    %9 = vector.shape_cast %8 : vector<32xf32> to vector<32x1xf32>
    %cst_8 = arith.constant 3.200000e+01 : f32
    %10 = vector.broadcast %cst_8 : f32 to vector<32x1xf32>
    %11 = arith.divf %9, %10 : vector<32x1xf32>
    %12 = vector.broadcast %11 : vector<32x1xf32> to vector<32x32xf32>
    %13 = arith.subf %3, %12 : vector<32x32xf32>
    %14 = arith.mulf %13, %13 : vector<32x32xf32>
    %cst_9 = arith.constant dense<0.000000e+00> : vector<32xf32>
    %15 = vector.multi_reduction <add>, %14, %cst_9 [1] : vector<32x32xf32> to vector<32xf32>
    %16 = vector.shape_cast %15 : vector<32xf32> to vector<32x1xf32>
    %cst_10 = arith.constant 3.200000e+01 : f32
    %17 = vector.broadcast %cst_10 : f32 to vector<32x1xf32>
    %18 = arith.divf %16, %17 : vector<32x1xf32>
    %cst_11 = arith.constant 9.99999974E-6 : f32
    %19 = vector.broadcast %cst_11 : f32 to vector<32x1xf32>
    %20 = arith.addf %18, %19 : vector<32x1xf32>
    %21 = math.rsqrt %20 : vector<32x1xf32>
    %22 = vector.broadcast %21 : vector<32x1xf32> to vector<32x32xf32>
    %23 = arith.mulf %13, %22 : vector<32x32xf32>
    %24 = vector.broadcast %5 : vector<1x32xf32> to vector<32x32xf32>
    %25 = arith.mulf %23, %24 : vector<32x32xf32>
    %26 = vector.broadcast %7 : vector<1x32xf32> to vector<32x32xf32>
    %27 = arith.addf %25, %26 : vector<32x32xf32>
    %28 = arith.truncf %27 : vector<32x32xf32> to vector<32x32xbf16>
    %c0_12 = arith.constant 0 : index
    %c0_13 = arith.constant 0 : index
    %c0_14 = arith.constant 0 : index
    %29 = vector.load %arg5[%c0_12, %c0_13, %c0_14] : memref<1x32x96xbf16, #tpu.memory_space<vmem>>, vector<1x32x96xbf16>
    %30 = vector.shape_cast %29 : vector<1x32x96xbf16> to vector<32x96xbf16>
    %cst_15 = arith.constant dense<0.000000e+00> : vector<32x96xf32>
    %31 = tpu.matmul %28, %30, %cst_15 {dimension_numbers = #tpu.dot_dimension_numbers<[1], [0], [0], [1], [0, 0, 1, 1], [], []>} : vector<32x32xbf16>, vector<32x96xbf16>, vector<32x96xf32> -> vector<32x96xf32>
    %32 = vector.shape_cast %31 : vector<32x96xf32> to vector<2x16x96xf32>
    %33 = vector.extract_strided_slice %32 {offsets = [0, 0, 0], sizes = [2, 16, 8], strides = [1, 1, 1]} : vector<2x16x96xf32> to vector<2x16x8xf32>
    %cst_16 = arith.constant 0.353553385 : f32
    %34 = vector.broadcast %cst_16 : f32 to vector<2x16x8xf32>
    %35 = arith.mulf %33, %34 : vector<2x16x8xf32>
    %36 = arith.truncf %35 : vector<2x16x8xf32> to vector<2x16x8xbf16>
    %37 = vector.extract_strided_slice %32 {offsets = [0, 0, 32], sizes = [2, 16, 8], strides = [1, 1, 1]} : vector<2x16x96xf32> to vector<2x16x8xf32>
    %38 = arith.truncf %37 : vector<2x16x8xf32> to vector<2x16x8xbf16>
    %39 = vector.extract_strided_slice %32 {offsets = [0, 0, 64], sizes = [2, 16, 8], strides = [1, 1, 1]} : vector<2x16x96xf32> to vector<2x16x8xf32>
    %40 = arith.truncf %39 : vector<2x16x8xf32> to vector<2x16x8xbf16>
    "tpu.trace_start"() <{level = 10 : i32, message = "bqd,bkd->bqk"}> : () -> ()
    %cst_17 = arith.constant dense<0.000000e+00> : vector<2x16x16xf32>
    %41 = tpu.matmul %36, %38, %cst_17 {dimension_numbers = #tpu.dot_dimension_numbers<[2], [2], [1], [1], [0, 0, 0, 1, 1, 1], [0], [0]>} : vector<2x16x8xbf16>, vector<2x16x8xbf16>, vector<2x16x16xf32> -> vector<2x16x16xf32>
    "tpu.trace_stop"() : () -> ()
    %cst_18 = arith.constant dense<0xFF800000> : vector<2x16xf32>
    %42 = vector.multi_reduction <maximumf>, %41, %cst_18 [2] : vector<2x16x16xf32> to vector<2x16xf32>
    %43 = vector.shape_cast %42 : vector<2x16xf32> to vector<2x16x1xf32>
    %44 = vector.broadcast %43 : vector<2x16x1xf32> to vector<2x16x16xf32>
    %45 = arith.subf %41, %44 : vector<2x16x16xf32>
    %46 = math.exp %45 : vector<2x16x16xf32>
    %cst_19 = arith.constant dense<0.000000e+00> : vector<2x16xf32>
    %47 = vector.multi_reduction <add>, %46, %cst_19 [2] : vector<2x16x16xf32> to vector<2x16xf32>
    %48 = vector.shape_cast %47 : vector<2x16xf32> to vector<2x16x1xf32>
    %49 = tpu.reciprocal %48 {approx = true} : vector<2x16x1xf32> -> vector<2x16x1xf32>
    %50 = vector.broadcast %49 : vector<2x16x1xf32> to vector<2x16x16xf32>
    %51 = arith.mulf %46, %50 : vector<2x16x16xf32>
    %52 = arith.truncf %51 : vector<2x16x16xf32> to vector<2x16x16xbf16>
    "tpu.trace_start"() <{level = 10 : i32, message = "bqk,bkd->bqd"}> : () -> ()
    %cst_20 = arith.constant dense<0.000000e+00> : vector<2x16x8xf32>
    %53 = tpu.matmul %52, %40, %cst_20 {dimension_numbers = #tpu.dot_dimension_numbers<[2], [1], [1], [2], [0, 0, 0, 1, 1, 2], [0], [0]>} : vector<2x16x16xbf16>, vector<2x16x8xbf16>, vector<2x16x8xf32> -> vector<2x16x8xf32>
    "tpu.trace_stop"() : () -> ()
    %54 = vector.shape_cast %53 : vector<2x16x8xf32> to vector<32x8xf32>
    %55 = arith.truncf %54 : vector<32x8xf32> to vector<32x8xbf16>
    %c0_21 = arith.constant 0 : index
    %c0_22 = arith.constant 0 : index
    %56 = vector.load %arg20[%c0_21, %c0_22] : memref<32x32xbf16, #tpu.memory_space<vmem>>, vector<32x8xbf16>
    tpu.vector_store %arg20[%c0_21, %c0_22], %55 {strides = array<i32>} : memref<32x32xbf16, #tpu.memory_space<vmem>>, vector<32x8xbf16>,
    %57 = vector.extract_strided_slice %32 {offsets = [0, 0, 8], sizes = [2, 16, 8], strides = [1, 1, 1]} : vector<2x16x96xf32> to vector<2x16x8xf32>
    %cst_23 = arith.constant 0.353553385 : f32
    %58 = vector.broadcast %cst_23 : f32 to vector<2x16x8xf32>
    %59 = arith.mulf %57, %58 : vector<2x16x8xf32>
    %60 = arith.truncf %59 : vector<2x16x8xf32> to vector<2x16x8xbf16>
    %61 = vector.extract_strided_slice %32 {offsets = [0, 0, 40], sizes = [2, 16, 8], strides = [1, 1, 1]} : vector<2x16x96xf32> to vector<2x16x8xf32>
    %62 = arith.truncf %61 : vector<2x16x8xf32> to vector<2x16x8xbf16>
    %63 = vector.extract_strided_slice %32 {offsets = [0, 0, 72], sizes = [2, 16, 8], strides = [1, 1, 1]} : vector<2x16x96xf32> to vector<2x16x8xf32>
    %64 = arith.truncf %63 : vector<2x16x8xf32> to vector<2x16x8xbf16>
    "tpu.trace_start"() <{level = 10 : i32, message = "bqd,bkd->bqk"}> : () -> ()
    %cst_24 = arith.constant dense<0.000000e+00> : vector<2x16x16xf32>
    %65 = tpu.matmul %60, %62, %cst_24 {dimension_numbers = #tpu.dot_dimension_numbers<[2], [2], [1], [1], [0, 0, 0, 1, 1, 1], [0], [0]>} : vector<2x16x8xbf16>, vector<2x16x8xbf16>, vector<2x16x16xf32> -> vector<2x16x16xf32>
    "tpu.trace_stop"() : () -> ()
    %cst_25 = arith.constant dense<0xFF800000> : vector<2x16xf32>
    %66 = vector.multi_reduction <maximumf>, %65, %cst_25 [2] : vector<2x16x16xf32> to vector<2x16xf32>
    %67 = vector.shape_cast %66 : vector<2x16xf32> to vector<2x16x1xf32>
    %68 = vector.broadcast %67 : vector<2x16x1xf32> to vector<2x16x16xf32>
    %69 = arith.subf %65, %68 : vector<2x16x16xf32>
    %70 = math.exp %69 : vector<2x16x16xf32>
    %cst_26 = arith.constant dense<0.000000e+00> : vector<2x16xf32>
    %71 = vector.multi_reduction <add>, %70, %cst_26 [2] : vector<2x16x16xf32> to vector<2x16xf32>
    %72 = vector.shape_cast %71 : vector<2x16xf32> to vector<2x16x1xf32>
    %73 = tpu.reciprocal %72 {approx = true} : vector<2x16x1xf32> -> vector<2x16x1xf32>
    %74 = vector.broadcast %73 : vector<2x16x1xf32> to vector<2x16x16xf32>
    %75 = arith.mulf %70, %74 : vector<2x16x16xf32>
    %76 = arith.truncf %75 : vector<2x16x16xf32> to vector<2x16x16xbf16>
    "tpu.trace_start"() <{level = 10 : i32, message = "bqk,bkd->bqd"}> : () -> ()
    %cst_27 = arith.constant dense<0.000000e+00> : vector<2x16x8xf32>
    %77 = tpu.matmul %76, %64, %cst_27 {dimension_numbers = #tpu.dot_dimension_numbers<[2], [1], [1], [2], [0, 0, 0, 1, 1, 2], [0], [0]>} : vector<2x16x16xbf16>, vector<2x16x8xbf16>, vector<2x16x8xf32> -> vector<2x16x8xf32>
    "tpu.trace_stop"() : () -> ()
    %78 = vector.shape_cast %77 : vector<2x16x8xf32> to vector<32x8xf32>
    %79 = arith.truncf %78 : vector<32x8xf32> to vector<32x8xbf16>
    %c0_28 = arith.constant 0 : index
    %c8 = arith.constant 8 : index
    %80 = vector.load %arg20[%c0_28, %c8] : memref<32x32xbf16, #tpu.memory_space<vmem>>, vector<32x8xbf16>
    tpu.vector_store %arg20[%c0_28, %c8], %79 {strides = array<i32>} : memref<32x32xbf16, #tpu.memory_space<vmem>>, vector<32x8xbf16>,
    %81 = vector.extract_strided_slice %32 {offsets = [0, 0, 16], sizes = [2, 16, 8], strides = [1, 1, 1]} : vector<2x16x96xf32> to vector<2x16x8xf32>
    %cst_29 = arith.constant 0.353553385 : f32
    %82 = vector.broadcast %cst_29 : f32 to vector<2x16x8xf32>
    %83 = arith.mulf %81, %82 : vector<2x16x8xf32>
    %84 = arith.truncf %83 : vector<2x16x8xf32> to vector<2x16x8xbf16>
    %85 = vector.extract_strided_slice %32 {offsets = [0, 0, 48], sizes = [2, 16, 8], strides = [1, 1, 1]} : vector<2x16x96xf32> to vector<2x16x8xf32>
    %86 = arith.truncf %85 : vector<2x16x8xf32> to vector<2x16x8xbf16>
    %87 = vector.extract_strided_slice %32 {offsets = [0, 0, 80], sizes = [2, 16, 8], strides = [1, 1, 1]} : vector<2x16x96xf32> to vector<2x16x8xf32>
    %88 = arith.truncf %87 : vector<2x16x8xf32> to vector<2x16x8xbf16>
    "tpu.trace_start"() <{level = 10 : i32, message = "bqd,bkd->bqk"}> : () -> ()
    %cst_30 = arith.constant dense<0.000000e+00> : vector<2x16x16xf32>
    %89 = tpu.matmul %84, %86, %cst_30 {dimension_numbers = #tpu.dot_dimension_numbers<[2], [2], [1], [1], [0, 0, 0, 1, 1, 1], [0], [0]>} : vector<2x16x8xbf16>, vector<2x16x8xbf16>, vector<2x16x16xf32> -> vector<2x16x16xf32>
    "tpu.trace_stop"() : () -> ()
    %cst_31 = arith.constant dense<0xFF800000> : vector<2x16xf32>
    %90 = vector.multi_reduction <maximumf>, %89, %cst_31 [2] : vector<2x16x16xf32> to vector<2x16xf32>
    %91 = vector.shape_cast %90 : vector<2x16xf32> to vector<2x16x1xf32>
    %92 = vector.broadcast %91 : vector<2x16x1xf32> to vector<2x16x16xf32>
    %93 = arith.subf %89, %92 : vector<2x16x16xf32>
    %94 = math.exp %93 : vector<2x16x16xf32>
    %cst_32 = arith.constant dense<0.000000e+00> : vector<2x16xf32>
    %95 = vector.multi_reduction <add>, %94, %cst_32 [2] : vector<2x16x16xf32> to vector<2x16xf32>
    %96 = vector.shape_cast %95 : vector<2x16xf32> to vector<2x16x1xf32>
    %97 = tpu.reciprocal %96 {approx = true} : vector<2x16x1xf32> -> vector<2x16x1xf32>
    %98 = vector.broadcast %97 : vector<2x16x1xf32> to vector<2x16x16xf32>
    %99 = arith.mulf %94, %98 : vector<2x16x16xf32>
    %100 = arith.truncf %99 : vector<2x16x16xf32> to vector<2x16x16xbf16>
    "tpu.trace_start"() <{level = 10 : i32, message = "bqk,bkd->bqd"}> : () -> ()
    %cst_33 = arith.constant dense<0.000000e+00> : vector<2x16x8xf32>
    %101 = tpu.matmul %100, %88, %cst_33 {dimension_numbers = #tpu.dot_dimension_numbers<[2], [1], [1], [2], [0, 0, 0, 1, 1, 2], [0], [0]>} : vector<2x16x16xbf16>, vector<2x16x8xbf16>, vector<2x16x8xf32> -> vector<2x16x8xf32>
    "tpu.trace_stop"() : () -> ()
    %102 = vector.shape_cast %101 : vector<2x16x8xf32> to vector<32x8xf32>
    %103 = arith.truncf %102 : vector<32x8xf32> to vector<32x8xbf16>
    %c0_34 = arith.constant 0 : index
    %c16 = arith.constant 16 : index
    %104 = vector.load %arg20[%c0_34, %c16] : memref<32x32xbf16, #tpu.memory_space<vmem>>, vector<32x8xbf16>
    tpu.vector_store %arg20[%c0_34, %c16], %103 {strides = array<i32>} : memref<32x32xbf16, #tpu.memory_space<vmem>>, vector<32x8xbf16>,
    %105 = vector.extract_strided_slice %32 {offsets = [0, 0, 24], sizes = [2, 16, 8], strides = [1, 1, 1]} : vector<2x16x96xf32> to vector<2x16x8xf32>
    %cst_35 = arith.constant 0.353553385 : f32
    %106 = vector.broadcast %cst_35 : f32 to vector<2x16x8xf32>
    %107 = arith.mulf %105, %106 : vector<2x16x8xf32>
    %108 = arith.truncf %107 : vector<2x16x8xf32> to vector<2x16x8xbf16>
    %109 = vector.extract_strided_slice %32 {offsets = [0, 0, 56], sizes = [2, 16, 8], strides = [1, 1, 1]} : vector<2x16x96xf32> to vector<2x16x8xf32>
    %110 = arith.truncf %109 : vector<2x16x8xf32> to vector<2x16x8xbf16>
    %111 = vector.extract_strided_slice %32 {offsets = [0, 0, 88], sizes = [2, 16, 8], strides = [1, 1, 1]} : vector<2x16x96xf32> to vector<2x16x8xf32>
    %112 = arith.truncf %111 : vector<2x16x8xf32> to vector<2x16x8xbf16>
    "tpu.trace_start"() <{level = 10 : i32, message = "bqd,bkd->bqk"}> : () -> ()
    %cst_36 = arith.constant dense<0.000000e+00> : vector<2x16x16xf32>
    %113 = tpu.matmul %108, %110, %cst_36 {dimension_numbers = #tpu.dot_dimension_numbers<[2], [2], [1], [1], [0, 0, 0, 1, 1, 1], [0], [0]>} : vector<2x16x8xbf16>, vector<2x16x8xbf16>, vector<2x16x16xf32> -> vector<2x16x16xf32>
    "tpu.trace_stop"() : () -> ()
    %cst_37 = arith.constant dense<0xFF800000> : vector<2x16xf32>
    %114 = vector.multi_reduction <maximumf>, %113, %cst_37 [2] : vector<2x16x16xf32> to vector<2x16xf32>
    %115 = vector.shape_cast %114 : vector<2x16xf32> to vector<2x16x1xf32>
    %116 = vector.broadcast %115 : vector<2x16x1xf32> to vector<2x16x16xf32>
    %117 = arith.subf %113, %116 : vector<2x16x16xf32>
    %118 = math.exp %117 : vector<2x16x16xf32>
    %cst_38 = arith.constant dense<0.000000e+00> : vector<2x16xf32>
    %119 = vector.multi_reduction <add>, %118, %cst_38 [2] : vector<2x16x16xf32> to vector<2x16xf32>
    %120 = vector.shape_cast %119 : vector<2x16xf32> to vector<2x16x1xf32>
    %121 = tpu.reciprocal %120 {approx = true} : vector<2x16x1xf32> -> vector<2x16x1xf32>
    %122 = vector.broadcast %121 : vector<2x16x1xf32> to vector<2x16x16xf32>
    %123 = arith.mulf %118, %122 : vector<2x16x16xf32>
    %124 = arith.truncf %123 : vector<2x16x16xf32> to vector<2x16x16xbf16>
    "tpu.trace_start"() <{level = 10 : i32, message = "bqk,bkd->bqd"}> : () -> ()
    %cst_39 = arith.constant dense<0.000000e+00> : vector<2x16x8xf32>
    %125 = tpu.matmul %124, %112, %cst_39 {dimension_numbers = #tpu.dot_dimension_numbers<[2], [1], [1], [2], [0, 0, 0, 1, 1, 2], [0], [0]>} : vector<2x16x16xbf16>, vector<2x16x8xbf16>, vector<2x16x8xf32> -> vector<2x16x8xf32>
    "tpu.trace_stop"() : () -> ()
    %126 = vector.shape_cast %125 : vector<2x16x8xf32> to vector<32x8xf32>
    %127 = arith.truncf %126 : vector<32x8xf32> to vector<32x8xbf16>
    %c0_40 = arith.constant 0 : index
    %c24 = arith.constant 24 : index
    %128 = vector.load %arg20[%c0_40, %c24] : memref<32x32xbf16, #tpu.memory_space<vmem>>, vector<32x8xbf16>
    tpu.vector_store %arg20[%c0_40, %c24], %127 {strides = array<i32>} : memref<32x32xbf16, #tpu.memory_space<vmem>>, vector<32x8xbf16>,
    %c0_41 = arith.constant 0 : index
    %c0_42 = arith.constant 0 : index
    %129 = vector.load %arg20[%c0_41, %c0_42] : memref<32x32xbf16, #tpu.memory_space<vmem>>, vector<32x32xbf16>
    %c0_43 = arith.constant 0 : index
    %c0_44 = arith.constant 0 : index
    %c0_45 = arith.constant 0 : index
    %130 = vector.load %arg6[%c0_43, %c0_44, %c0_45] : memref<1x32x32xbf16, #tpu.memory_space<vmem>>, vector<1x32x32xbf16>
    %131 = vector.shape_cast %130 : vector<1x32x32xbf16> to vector<32x32xbf16>
    %cst_46 = arith.constant dense<0.000000e+00> : vector<32x32xf32>
    %132 = tpu.matmul %129, %131, %cst_46 {dimension_numbers = #tpu.dot_dimension_numbers<[1], [0], [0], [1], [0, 0, 1, 1], [], []>} : vector<32x32xbf16>, vector<32x32xbf16>, vector<32x32xf32> -> vector<32x32xf32>
    %133 = arith.addf %3, %132 : vector<32x32xf32>
    %c0_47 = arith.constant 0 : index
    %c0_48 = arith.constant 0 : index
    %c0_49 = arith.constant 0 : index
    %134 = vector.load %arg7[%c0_47, %c0_48, %c0_49] : memref<1x1x32xf32, #tpu.memory_space<vmem>>, vector<1x1x32xf32>
    %135 = vector.shape_cast %134 : vector<1x1x32xf32> to vector<1x32xf32>
    %136 = vector.broadcast %135 : vector<1x32xf32> to vector<32x32xf32>
    %137 = arith.addf %133, %136 : vector<32x32xf32>
    %c0_50 = arith.constant 0 : index
    %c0_51 = arith.constant 0 : index
    %c0_52 = arith.constant 0 : index
    %138 = vector.load %arg8[%c0_50, %c0_51, %c0_52] : memref<1x1x32xf32, #tpu.memory_space<vmem>>, vector<1x1x32xf32>
    %139 = vector.shape_cast %138 : vector<1x1x32xf32> to vector<1x32xf32>
    %c0_53 = arith.constant 0 : index
    %c0_54 = arith.constant 0 : index
    %c0_55 = arith.constant 0 : index
    %140 = vector.load %arg9[%c0_53, %c0_54, %c0_55] : memref<1x1x32xf32, #tpu.memory_space<vmem>>, vector<1x1x32xf32>
    %141 = vector.shape_cast %140 : vector<1x1x32xf32> to vector<1x32xf32>
    %cst_56 = arith.constant dense<0.000000e+00> : vector<32xf32>
    %142 = vector.multi_reduction <add>, %137, %cst_56 [1] : vector<32x32xf32> to vector<32xf32>
    %143 = vector.shape_cast %142 : vector<32xf32> to vector<32x1xf32>
    %cst_57 = arith.constant 3.200000e+01 : f32
    %144 = vector.broadcast %cst_57 : f32 to vector<32x1xf32>
    %145 = arith.divf %143, %144 : vector<32x1xf32>
    %146 = vector.broadcast %145 : vector<32x1xf32> to vector<32x32xf32>
    %147 = arith.subf %137, %146 : vector<32x32xf32>
    %148 = arith.mulf %147, %147 : vector<32x32xf32>
    %cst_58 = arith.constant dense<0.000000e+00> : vector<32xf32>
    %149 = vector.multi_reduction <add>, %148, %cst_58 [1] : vector<32x32xf32> to vector<32xf32>
    %150 = vector.shape_cast %149 : vector<32xf32> to vector<32x1xf32>
    %cst_59 = arith.constant 3.200000e+01 : f32
    %151 = vector.broadcast %cst_59 : f32 to vector<32x1xf32>
    %152 = arith.divf %150, %151 : vector<32x1xf32>
    %cst_60 = arith.constant 9.99999974E-6 : f32
    %153 = vector.broadcast %cst_60 : f32 to vector<32x1xf32>
    %154 = arith.addf %152, %153 : vector<32x1xf32>
    %155 = math.rsqrt %154 : vector<32x1xf32>
    %156 = vector.broadcast %155 : vector<32x1xf32> to vector<32x32xf32>
    %157 = arith.mulf %147, %156 : vector<32x32xf32>
    %158 = vector.broadcast %139 : vector<1x32xf32> to vector<32x32xf32>
    %159 = arith.mulf %157, %158 : vector<32x32xf32>
    %160 = vector.broadcast %141 : vector<1x32xf32> to vector<32x32xf32>
    %161 = arith.addf %159, %160 : vector<32x32xf32>
    %162 = arith.truncf %161 : vector<32x32xf32> to vector<32x32xbf16>
    %c0_61 = arith.constant 0 : index
    %c0_62 = arith.constant 0 : index
    %c0_63 = arith.constant 0 : index
    %163 = vector.load %arg10[%c0_61, %c0_62, %c0_63] : memref<1x32x128xbf16, #tpu.memory_space<vmem>>, vector<1x32x128xbf16>
    %164 = vector.shape_cast %163 : vector<1x32x128xbf16> to vector<32x128xbf16>
    %cst_64 = arith.constant dense<0.000000e+00> : vector<32x128xf32>
    %165 = tpu.matmul %162, %164, %cst_64 {dimension_numbers = #tpu.dot_dimension_numbers<[1], [0], [0], [1], [0, 0, 1, 1], [], []>} : vector<32x32xbf16>, vector<32x128xbf16>, vector<32x128xf32> -> vector<32x128xf32>
    %c0_65 = arith.constant 0 : index
    %c0_66 = arith.constant 0 : index
    %c0_67 = arith.constant 0 : index
    %166 = vector.load %arg11[%c0_65, %c0_66, %c0_67] : memref<1x1x128xf32, #tpu.memory_space<vmem>>, vector<1x1x128xf32>
    %167 = vector.shape_cast %166 : vector<1x1x128xf32> to vector<1x128xf32>
    %168 = vector.broadcast %167 : vector<1x128xf32> to vector<32x128xf32>
    %169 = arith.addf %165, %168 : vector<32x128xf32>
    %cst_68 = arith.constant 5.000000e-01 : f32
    %170 = vector.broadcast %cst_68 : f32 to vector<32x128xf32>
    %171 = arith.mulf %170, %169 : vector<32x128xf32>
    %cst_69 = arith.constant 4.471500e-02 : f32
    %172 = vector.broadcast %cst_69 : f32 to vector<32x128xf32>
    %173 = arith.mulf %172, %169 : vector<32x128xf32>
    %174 = arith.mulf %173, %169 : vector<32x128xf32>
    %175 = arith.mulf %174, %169 : vector<32x128xf32>
    %176 = arith.addf %169, %175 : vector<32x128xf32>
    %cst_70 = arith.constant 0.797884583 : f32
    %177 = vector.broadcast %cst_70 : f32 to vector<32x128xf32>
    %178 = arith.mulf %177, %176 : vector<32x128xf32>
    %179 = math.tanh %178 : vector<32x128xf32>
    %cst_71 = arith.constant 1.000000e+00 : f32
    %180 = vector.broadcast %cst_71 : f32 to vector<32x128xf32>
    %181 = arith.addf %180, %179 : vector<32x128xf32>
    %182 = arith.mulf %171, %181 : vector<32x128xf32>
    %183 = arith.truncf %182 : vector<32x128xf32> to vector<32x128xbf16>
    %c0_72 = arith.constant 0 : index
    %c0_73 = arith.constant 0 : index
    %c0_74 = arith.constant 0 : index
    %184 = vector.load %arg12[%c0_72, %c0_73, %c0_74] : memref<1x128x32xbf16, #tpu.memory_space<vmem>>, vector<1x128x32xbf16>
    %185 = vector.shape_cast %184 : vector<1x128x32xbf16> to vector<128x32xbf16>
    %cst_75 = arith.constant dense<0.000000e+00> : vector<32x32xf32>
    %186 = tpu.matmul %183, %185, %cst_75 {dimension_numbers = #tpu.dot_dimension_numbers<[1], [0], [0], [1], [0, 0, 1, 1], [], []>} : vector<32x128xbf16>, vector<128x32xbf16>, vector<32x32xf32> -> vector<32x32xf32>
    %c0_76 = arith.constant 0 : index
    %c0_77 = arith.constant 0 : index
    %c0_78 = arith.constant 0 : index
    %187 = vector.load %arg13[%c0_76, %c0_77, %c0_78] : memref<1x1x32xf32, #tpu.memory_space<vmem>>, vector<1x1x32xf32>
    %188 = vector.shape_cast %187 : vector<1x1x32xf32> to vector<1x32xf32>
    %189 = vector.broadcast %188 : vector<1x32xf32> to vector<32x32xf32>
    %190 = arith.addf %186, %189 : vector<32x32xf32>
    %191 = arith.addf %137, %190 : vector<32x32xf32>
    %c0_79 = arith.constant 0 : index
    %c0_80 = arith.constant 0 : index
    %192 = vector.load %arg19[%c0_79, %c0_80] : memref<32x32xf32, #tpu.memory_space<vmem>>, vector<32x32xf32>
    tpu.vector_store %arg19[%c0_79, %c0_80], %191 {strides = array<i32>} : memref<32x32xf32, #tpu.memory_space<vmem>>, vector<32x32xf32>,
    %c1_i32 = arith.constant 1 : i32
    %193 = arith.cmpi eq, %arg1, %c1_i32 : i32
    %194 = arith.extui %193 : i1 to i32
    %c0_i32_81 = arith.constant 0 : i32
    %195 = arith.cmpi ne, %194, %c0_i32_81 : i32
    scf.if %195 {
      %196 = vector.shape_cast %191 : vector<32x32xf32> to vector<2x16x32xf32>
      %197 = vector.extract_strided_slice %196 {offsets = [0, 8, 0], sizes = [2, 8, 32], strides = [1, 1, 1]} : vector<2x16x32xf32> to vector<2x8x32xf32>
      %198 = vector.shape_cast %197 : vector<2x8x32xf32> to vector<16x32xf32>
      %c0_82 = arith.constant 0 : index
      %c0_83 = arith.constant 0 : index
      %199 = vector.load %arg14[%c0_82, %c0_83] : memref<1x32xf32, #tpu.memory_space<vmem>>, vector<1x32xf32>
      %c0_84 = arith.constant 0 : index
      %c0_85 = arith.constant 0 : index
      %200 = vector.load %arg15[%c0_84, %c0_85] : memref<1x32xf32, #tpu.memory_space<vmem>>, vector<1x32xf32>
      %cst_86 = arith.constant dense<0.000000e+00> : vector<16xf32>
      %201 = vector.multi_reduction <add>, %198, %cst_86 [1] : vector<16x32xf32> to vector<16xf32>
      %202 = vector.shape_cast %201 : vector<16xf32> to vector<16x1xf32>
      %cst_87 = arith.constant 3.200000e+01 : f32
      %203 = vector.broadcast %cst_87 : f32 to vector<16x1xf32>
      %204 = arith.divf %202, %203 : vector<16x1xf32>
      %205 = vector.broadcast %204 : vector<16x1xf32> to vector<16x32xf32>
      %206 = arith.subf %198, %205 : vector<16x32xf32>
      %207 = arith.mulf %206, %206 : vector<16x32xf32>
      %cst_88 = arith.constant dense<0.000000e+00> : vector<16xf32>
      %208 = vector.multi_reduction <add>, %207, %cst_88 [1] : vector<16x32xf32> to vector<16xf32>
      %209 = vector.shape_cast %208 : vector<16xf32> to vector<16x1xf32>
      %cst_89 = arith.constant 3.200000e+01 : f32
      %210 = vector.broadcast %cst_89 : f32 to vector<16x1xf32>
      %211 = arith.divf %209, %210 : vector<16x1xf32>
      %cst_90 = arith.constant 9.99999974E-6 : f32
      %212 = vector.broadcast %cst_90 : f32 to vector<16x1xf32>
      %213 = arith.addf %211, %212 : vector<16x1xf32>
      %214 = math.rsqrt %213 : vector<16x1xf32>
      %215 = vector.broadcast %214 : vector<16x1xf32> to vector<16x32xf32>
      %216 = arith.mulf %206, %215 : vector<16x32xf32>
      %217 = vector.broadcast %199 : vector<1x32xf32> to vector<16x32xf32>
      %218 = arith.mulf %216, %217 : vector<16x32xf32>
      %219 = vector.broadcast %200 : vector<1x32xf32> to vector<16x32xf32>
      %220 = arith.addf %218, %219 : vector<16x32xf32>
      %221 = arith.truncf %220 : vector<16x32xf32> to vector<16x32xbf16>
      %c0_91 = arith.constant 0 : index
      %c0_92 = arith.constant 0 : index
      %222 = vector.load %arg16[%c0_91, %c0_92] : memref<32x128xbf16, #tpu.memory_space<vmem>>, vector<32x128xbf16>
      %cst_93 = arith.constant dense<0.000000e+00> : vector<16x128xf32>
      %223 = tpu.matmul %221, %222, %cst_93 {dimension_numbers = #tpu.dot_dimension_numbers<[1], [0], [0], [1], [0, 0, 1, 1], [], []>} : vector<16x32xbf16>, vector<32x128xbf16>, vector<16x128xf32> -> vector<16x128xf32>
      %c0_94 = arith.constant 0 : index
      %c0_95 = arith.constant 0 : index
      %224 = vector.load %arg17[%c0_94, %c0_95] : memref<1x128xf32, #tpu.memory_space<vmem>>, vector<1x128xf32>
      %225 = vector.broadcast %224 : vector<1x128xf32> to vector<16x128xf32>
      %226 = arith.addf %223, %225 : vector<16x128xf32>
      %227 = vector.shape_cast %226 : vector<16x128xf32> to vector<2x8x128xf32>
      %c0_96 = arith.constant 0 : index
      %c0_97 = arith.constant 0 : index
      %c0_98 = arith.constant 0 : index
      %228 = vector.load %arg18[%c0_96, %c0_97, %c0_98] : memref<2x8x128xf32, #tpu.memory_space<vmem>>, vector<2x8x128xf32>
      tpu.vector_store %arg18[%c0_96, %c0_97, %c0_98], %227 {strides = array<i32>} : memref<2x8x128xf32, #tpu.memory_space<vmem>>, vector<2x8x128xf32>,
    } else {
    }
    return
  }
  func.func @transform_0(%arg0: i32, %arg1: i32) -> (i32, i32, i32) {
    %c0_i32 = arith.constant 0 : i32
    %c0_i32_0 = arith.constant 0 : i32
    %c0_i32_1 = arith.constant 0 : i32
    return %arg0, %c0_i32, %c0_i32_0 : i32, i32, i32
  }
  func.func @transform_1(%arg0: i32, %arg1: i32) -> (i32, i32, i32) {
    %c0_i32 = arith.constant 0 : i32
    %c0_i32_0 = arith.constant 0 : i32
    %c0_i32_1 = arith.constant 0 : i32
    return %arg1, %c0_i32, %c0_i32_0 : i32, i32, i32
  }
  func.func @transform_2(%arg0: i32, %arg1: i32) -> (i32, i32, i32) {
    %c0_i32 = arith.constant 0 : i32
    %c0_i32_0 = arith.constant 0 : i32
    %c0_i32_1 = arith.constant 0 : i32
    return %arg1, %c0_i32, %c0_i32_0 : i32, i32, i32
  }
  func.func @transform_3(%arg0: i32, %arg1: i32) -> (i32, i32, i32) {
    %c0_i32 = arith.constant 0 : i32
    %c0_i32_0 = arith.constant 0 : i32
    %c0_i32_1 = arith.constant 0 : i32
    return %arg1, %c0_i32, %c0_i32_0 : i32, i32, i32
  }
  func.func @transform_4(%arg0: i32, %arg1: i32) -> (i32, i32, i32) {
    %c0_i32 = arith.constant 0 : i32
    %c0_i32_0 = arith.constant 0 : i32
    %c0_i32_1 = arith.constant 0 : i32
    return %arg1, %c0_i32, %c0_i32_0 : i32, i32, i32
  }
  func.func @transform_5(%arg0: i32, %arg1: i32) -> (i32, i32, i32) {
    %c0_i32 = arith.constant 0 : i32
    %c0_i32_0 = arith.constant 0 : i32
    %c0_i32_1 = arith.constant 0 : i32
    return %arg1, %c0_i32, %c0_i32_0 : i32, i32, i32
  }
  func.func @transform_6(%arg0: i32, %arg1: i32) -> (i32, i32, i32) {
    %c0_i32 = arith.constant 0 : i32
    %c0_i32_0 = arith.constant 0 : i32
    %c0_i32_1 = arith.constant 0 : i32
    return %arg1, %c0_i32, %c0_i32_0 : i32, i32, i32
  }
  func.func @transform_7(%arg0: i32, %arg1: i32) -> (i32, i32, i32) {
    %c0_i32 = arith.constant 0 : i32
    %c0_i32_0 = arith.constant 0 : i32
    %c0_i32_1 = arith.constant 0 : i32
    return %arg1, %c0_i32, %c0_i32_0 : i32, i32, i32
  }
  func.func @transform_8(%arg0: i32, %arg1: i32) -> (i32, i32, i32) {
    %c0_i32 = arith.constant 0 : i32
    %c0_i32_0 = arith.constant 0 : i32
    %c0_i32_1 = arith.constant 0 : i32
    return %arg1, %c0_i32, %c0_i32_0 : i32, i32, i32
  }
  func.func @transform_9(%arg0: i32, %arg1: i32) -> (i32, i32, i32) {
    %c0_i32 = arith.constant 0 : i32
    %c0_i32_0 = arith.constant 0 : i32
    %c0_i32_1 = arith.constant 0 : i32
    return %arg1, %c0_i32, %c0_i32_0 : i32, i32, i32
  }
  func.func @transform_10(%arg0: i32, %arg1: i32) -> (i32, i32, i32) {
    %c0_i32 = arith.constant 0 : i32
    %c0_i32_0 = arith.constant 0 : i32
    %c0_i32_1 = arith.constant 0 : i32
    return %arg1, %c0_i32, %c0_i32_0 : i32, i32, i32
  }
  func.func @transform_11(%arg0: i32, %arg1: i32) -> (i32, i32, i32) {
    %c0_i32 = arith.constant 0 : i32
    %c0_i32_0 = arith.constant 0 : i32
    %c0_i32_1 = arith.constant 0 : i32
    return %arg1, %c0_i32, %c0_i32_0 : i32, i32, i32
  }
  func.func @transform_12(%arg0: i32, %arg1: i32) -> (i32, i32) {
    %c0_i32 = arith.constant 0 : i32
    %c0_i32_0 = arith.constant 0 : i32
    %c0_i32_1 = arith.constant 0 : i32
    return %c0_i32, %c0_i32_0 : i32, i32
  }
  func.func @transform_13(%arg0: i32, %arg1: i32) -> (i32, i32) {
    %c0_i32 = arith.constant 0 : i32
    %c0_i32_0 = arith.constant 0 : i32
    %c0_i32_1 = arith.constant 0 : i32
    return %c0_i32, %c0_i32_0 : i32, i32
  }
  func.func @transform_14(%arg0: i32, %arg1: i32) -> (i32, i32) {
    %c0_i32 = arith.constant 0 : i32
    %c0_i32_0 = arith.constant 0 : i32
    %c0_i32_1 = arith.constant 0 : i32
    return %c0_i32, %c0_i32_0 : i32, i32
  }
  func.func @transform_15(%arg0: i32, %arg1: i32) -> (i32, i32) {
    %c0_i32 = arith.constant 0 : i32
    %c0_i32_0 = arith.constant 0 : i32
    %c0_i32_1 = arith.constant 0 : i32
    return %c0_i32, %c0_i32_0 : i32, i32
  }
  func.func @transform_16(%arg0: i32, %arg1: i32) -> (i32, i32, i32) {
    %c0_i32 = arith.constant 0 : i32
    %c0_i32_0 = arith.constant 0 : i32
    %c0_i32_1 = arith.constant 0 : i32
    return %arg0, %c0_i32, %c0_i32_0 : i32, i32, i32
  }
}

</mosaic_0001>

<llo_original>
// kernel: vit_decoder_forward.1
$region0: #{vit_decoder_forward.1}
  #allocation0 [shape = 'u32[]', space=smem, size = 0x4, offset = 0x4, fixed_abs, tag = 'smem constant byte address 0x4 - core index']
  #allocation1 [shape = 'u32[72,128]{1,0:T(1,128)}', space=vmem, size = 0x9000, scoped, tag = 'internal scratch']
  #allocation2 [shape = 'f32[32,32]{1,0:T(8,128)}', space=vmem, size = 0x4000, scoped, tag = 'scratch operand']
  #allocation3 [shape = 'bf16[32,32]{1,0:T(8,128)(2,1)}', space=vmem, size = 0x2000, scoped, tag = 'scratch operand']
  %s0 = inlined_call_operand.vmem [shape: f32[4,16,32], index: 0, kind: input, shape index: {}]
  %s1 = inlined_call_operand.vmem [shape: f32[2,1,32], index: 1, kind: input, shape index: {}]
  %s2 = inlined_call_operand.hbm [shape: f32[2,1,32], index: 2, kind: input, shape index: {}]
  %s3 = inlined_call_operand.vmem [shape: bf16[2,32,96], index: 3, kind: input, shape index: {}]
  %s4 = inlined_call_operand.vmem [shape: bf16[2,32,32], index: 4, kind: input, shape index: {}]
  %s5 = inlined_call_operand.hbm [shape: f32[2,1,32], index: 5, kind: input, shape index: {}]
  %s6 = inlined_call_operand.vmem [shape: f32[2,1,32], index: 6, kind: input, shape index: {}]
  %s7 = inlined_call_operand.hbm [shape: f32[2,1,32], index: 7, kind: input, shape index: {}]
  %s8 = inlined_call_operand.vmem [shape: bf16[2,32,128], index: 8, kind: input, shape index: {}]
  %s9 = inlined_call_operand.hbm [shape: f32[2,1,128], index: 9, kind: input, shape index: {}]
  %s10 = inlined_call_operand.vmem [shape: bf16[2,128,32], index: 10, kind: input, shape index: {}]
  %s11 = inlined_call_operand.hbm [shape: f32[2,1,32], index: 11, kind: input, shape index: {}]
  %s12 = inlined_call_operand.vmem [shape: f32[1,32], index: 12, kind: input, shape index: {}]
  %s13 = inlined_call_operand.vmem [shape: f32[1,32], index: 13, kind: input, shape index: {}]
  %s14 = inlined_call_operand.hbm [shape: bf16[32,128], index: 14, kind: input, shape index: {}]
  %s15 = inlined_call_operand.hbm [shape: f32[1,128], index: 15, kind: input, shape index: {}]
  %s16 = inlined_call_operand.hbm [shape: f32[4,8,128], index: 16, kind: output, shape index: {}]
  %s17 = sld [smem:[#allocation0]]
  $region133: #{vit_decoder_forward.1} parent=0
    _
  %s19 = ssub.s32 1, %s17
  %s20 = scalar_select 0, %s19, %s17
  $region1: #{vit_decoder_forward.1} parent=0
    #allocation4 [shape = 'u8[1024]{0}', space=vmem, size = 0x400, scoped, tag = 'input window, operand 2']
    #allocation5 [shape = 's32[2]{0}', space=sflag, size = 0x8, scoped, tag = 'scoped memory for vit_decoder_forward.1']
    #allocation6 [shape = 's32[2]{0}', space=sflag, size = 0x8, scoped, tag = 'scoped memory for vit_decoder_forward.1']
    #allocation7 [shape = 'u8[1024]{0}', space=vmem, size = 0x400, scoped, tag = 'input window, operand 5']
    #allocation8 [shape = 's32[2]{0}', space=sflag, size = 0x8, scoped, tag = 'scoped memory for vit_decoder_forward.1']
    #allocation9 [shape = 'u8[1024]{0}', space=vmem, size = 0x400, scoped, tag = 'input window, operand 7']
    #allocation10 [shape = 'u8[1024]{0}', space=vmem, size = 0x400, scoped, tag = 'input window, operand 9']
    #allocation11 [shape = 's32[2]{0}', space=sflag, size = 0x8, scoped, tag = 'scoped memory for vit_decoder_forward.1']
    #allocation12 [shape = 'u8[1024]{0}', space=vmem, size = 0x400, scoped, tag = 'input window, operand 11']
    #allocation13 [shape = 'u8[8192]{0}', space=vmem, size = 0x2000, scoped, tag = 'input window, operand 14, single buffered']
    #allocation14 [shape = 's32[1]{0}', space=sflag, size = 0x4, scoped, tag = 'scoped memory for vit_decoder_forward.1']
    #allocation15 [shape = 'u8[512]{0}', space=vmem, size = 0x400, scoped, tag = 'input window, operand 15, single buffered']
    #allocation16 [shape = 'u8[16384]{0}', space=vmem, size = 0x4000, scoped, tag = 'output window, operand 0']
    %21 = vsyncpa [#allocation5], 0
    %s22 = scalar_lea.sflag [#allocation5], 1
    %23 = vsyncpa %s22, 0
    %24 = vsyncpa [#allocation8], 0
    %s25 = scalar_lea.sflag [#allocation8], 1
    %26 = vsyncpa %s25, 0
    %27 = vsyncpa [#allocation11], 0
    %s28 = scalar_lea.sflag [#allocation11], 1
    %29 = vsyncpa %s28, 0
    %30 = vsyncpa [#allocation14], 0
    %31 = vsyncpa [#allocation6], 0
    %s32 = scalar_lea.sflag [#allocation6], 1
    %33 = vsyncpa %s32, 0
    loop: start=0, step=1, limit=6
    $region2: #{vit_decoder_forward.1} parent=1 // loop_pre_header
      _
    $region3: #{vit_decoder_forward.1} parent=1 // loop_header
      %s35 = sphi 0, %s39
      %p36 = scmp.ge.s32.totalorder %s35, 6
      %s42 = sphi 0, %s54
      %s43 = sphi 0, %s50
      %s44 = sphi 0, %s42
      %s45 = sphi 0, %s43
      %s46 = sphi 0, %s44
      %s47 = sphi 0, %s45
      %s57 = sphi 0, %s59
      %s60 = sphi 0, %s57
      %s61 = sphi 0, %s60
      %s77 = sphi 0, %s61
      %s83 = sphi 0, %s85
      %s86 = sphi 0, %s83
      %s87 = sphi 0, %s86
      %s103 = sphi 0, %s87
      %s109 = sphi 0, %s111
      %s112 = sphi 0, %s109
      %s113 = sphi 0, %s112
      %s129 = sphi 0, %s113
      %s135 = sphi 0, %s137
      %s138 = sphi 0, %s135
      %s139 = sphi 0, %s138
      %s155 = sphi 0, %s139
      %s161 = sphi 0, %s163
      %s164 = sphi 0, %s161
      %s165 = sphi 0, %s164
      %s181 = sphi 0, %s165
      %s187 = sphi 0, %s189
      %s190 = sphi 0, %s187
      %s191 = sphi 0, %s190
      %s207 = sphi 0, %s191
      %s213 = sphi 0, %s215
      %s216 = sphi 0, %s213
      %s217 = sphi 0, %s216
      %s233 = sphi 0, %s217
      %s239 = sphi 0, %s241
      %s242 = sphi 0, %s239
      %s243 = sphi 0, %s242
      %s259 = sphi 0, %s243
      %s265 = sphi 0, %s267
      %s268 = sphi 0, %s265
      %s269 = sphi 0, %s268
      %s285 = sphi 0, %s269
      %s291 = sphi 0, %s293
      %s294 = sphi 0, %s291
      %s295 = sphi 0, %s294
      %s311 = sphi 0, %s295
      %s317 = sphi 0, %s319
      %s320 = sphi 0, %s317
      %s321 = sphi 0, %s320
      %s337 = sphi 0, %s321
      %s343 = sphi 0, %s345
      %s346 = sphi 0, %s343
      %s347 = sphi 0, %s346
      %s363 = sphi 0, %s347
      %s367 = sphi 0, %s367
      %s369 = sphi 0, %s367
      %s370 = sphi 0, %s369
      %s384 = sphi 0, %s370
      %s388 = sphi 0, %s388
      %s390 = sphi 0, %s388
      %s391 = sphi 0, %s390
      %s405 = sphi 0, %s391
      %s409 = sphi 0, %s409
      %s411 = sphi 0, %s409
      %s412 = sphi 0, %s411
      %s426 = sphi 0, %s412
      %s430 = sphi 0, %s430
      %s432 = sphi 0, %s430
      %s433 = sphi 0, %s432
      %s447 = sphi 0, %s433
      %s453 = sphi 0, %s455
      %s456 = sphi 0, %s453
      %s457 = sphi 0, %s456
      %s473 = sphi 0, %s457
    $region4: #{vit_decoder_forward.1} parent=1 // loop_header_branch
      %38 = sbr.rel (%p36) target = $region8
    $region5: #{vit_decoder_forward.1} parent=1 // loop_body
      %s40 = ssub.s32 %s35, 1
      %s41 = ssub.s32 %s35, 2
      %s48 = sadd.s32 1, %s43
      %p49 = scmp.ge.s32.totalorder %s48, 2
      %s50 = scalar_select %p49, 0, %s48
      %s51 = sadd.s32 1, %s42
      %s52 = scalar_select %p49, %s51, %s42
      %p53 = scmp.ge.s32.totalorder %s52, 2
      %s54 = scalar_select %p53, 0, %s52
      %s55 = ssub.s32 %s42, %s54
      %p56 = scmp.eq.s32.totalorder %s55, 0
      %s58 = sadd.s32 %s57, 1
      %s59 = scalar_select %p56, %s57, %s58
      %p62 = pneg %p56
      %p63 = scmp.eq.s32.totalorder %s35, 3
      %p64 = por %p62, %p63
      %p65 = scmp.ne.s32.totalorder %s57, %s60
      %p66 = scmp.eq.s32.totalorder %s35, 0
      %p67 = por %p65, %p66
      %p68 = scmp.ne.s32.totalorder %s57, %s60
      %p69 = scmp.eq.s32.totalorder %s40, 3
      %p70 = por %p68, %p69
      %p71 = scmp.ne.s32.totalorder %s60, %s61
      %p72 = scmp.eq.s32.totalorder %s40, 0
      %p73 = por %p71, %p72
      %p74 = scmp.ne.s32.totalorder %s60, %s61
      %p75 = scmp.eq.s32.totalorder %s41, 3
      %p76 = por %p74, %p75
      %p78 = scmp.ne.s32.totalorder %s61, %s77
      %p79 = scmp.eq.s32.totalorder %s41, 0
      %p80 = por %p78, %p79
      %s81 = ssub.s32 %s43, %s50
      %p82 = scmp.eq.s32.totalorder %s81, 0
      %s84 = sadd.s32 %s83, 1
      %s85 = scalar_select %p82, %s83, %s84
      %p88 = pneg %p82
      %p89 = scmp.eq.s32.totalorder %s35, 3
      %p90 = por %p88, %p89
      %p91 = scmp.ne.s32.totalorder %s83, %s86
      %p92 = scmp.eq.s32.totalorder %s35, 0
      %p93 = por %p91, %p92
      %p94 = scmp.ne.s32.totalorder %s83, %s86
      %p95 = scmp.eq.s32.totalorder %s40, 3
      %p96 = por %p94, %p95
      %p97 = scmp.ne.s32.totalorder %s86, %s87
      %p98 = scmp.eq.s32.totalorder %s40, 0
      %p99 = por %p97, %p98
      %p100 = scmp.ne.s32.totalorder %s86, %s87
      %p101 = scmp.eq.s32.totalorder %s41, 3
      %p102 = por %p100, %p101
      %p104 = scmp.ne.s32.totalorder %s87, %s103
      %p105 = scmp.eq.s32.totalorder %s41, 0
      %p106 = por %p104, %p105
      %s107 = ssub.s32 %s43, %s50
      %p108 = scmp.eq.s32.totalorder %s107, 0
      %s110 = sadd.s32 %s109, 1
      %s111 = scalar_select %p108, %s109, %s110
      %p114 = pneg %p108
      %p115 = scmp.eq.s32.totalorder %s35, 3
      %p116 = por %p114, %p115
      %p117 = scmp.ne.s32.totalorder %s109, %s112
      %p118 = scmp.eq.s32.totalorder %s35, 0
      %p119 = por %p117, %p118
      %p120 = scmp.ne.s32.totalorder %s109, %s112
      %p121 = scmp.eq.s32.totalorder %s40, 3
      %p122 = por %p120, %p121
      %p123 = scmp.ne.s32.totalorder %s112, %s113
      %p124 = scmp.eq.s32.totalorder %s40, 0
      %p125 = por %p123, %p124
      %p126 = scmp.ne.s32.totalorder %s112, %s113
      %p127 = scmp.eq.s32.totalorder %s41, 3
      %p128 = por %p126, %p127
      %p130 = scmp.ne.s32.totalorder %s113, %s129
      %p131 = scmp.eq.s32.totalorder %s41, 0
      %p132 = por %p130, %p131
      %s133 = ssub.s32 %s43, %s50
      %p134 = scmp.eq.s32.totalorder %s133, 0
      %s136 = sadd.s32 %s135, 1
      %s137 = scalar_select %p134, %s135, %s136
      %p140 = pneg %p134
      %p141 = scmp.eq.s32.totalorder %s35, 3
      %p142 = por %p140, %p141
      %p143 = scmp.ne.s32.totalorder %s135, %s138
      %p144 = scmp.eq.s32.totalorder %s35, 0
      %p145 = por %p143, %p144
      %p146 = scmp.ne.s32.totalorder %s135, %s138
      %p147 = scmp.eq.s32.totalorder %s40, 3
      %p148 = por %p146, %p147
      %p149 = scmp.ne.s32.totalorder %s138, %s139
      %p150 = scmp.eq.s32.totalorder %s40, 0
      %p151 = por %p149, %p150
      %p152 = scmp.ne.s32.totalorder %s138, %s139
      %p153 = scmp.eq.s32.totalorder %s41, 3
      %p154 = por %p152, %p153
      %p156 = scmp.ne.s32.totalorder %s139, %s155
      %p157 = scmp.eq.s32.totalorder %s41, 0
      %p158 = por %p156, %p157
      %s159 = ssub.s32 %s43, %s50
      %p160 = scmp.eq.s32.totalorder %s159, 0
      %s162 = sadd.s32 %s161, 1
      %s163 = scalar_select %p160, %s161, %s162
      %p166 = pneg %p160
      %p167 = scmp.eq.s32.totalorder %s35, 3
      %p168 = por %p166, %p167
      %p169 = scmp.ne.s32.totalorder %s161, %s164
      %p170 = scmp.eq.s32.totalorder %s35, 0
      %p171 = por %p169, %p170
      %p172 = scmp.ne.s32.totalorder %s161, %s164
      %p173 = scmp.eq.s32.totalorder %s40, 3
      %p174 = por %p172, %p173
      %p175 = scmp.ne.s32.totalorder %s164, %s165
      %p176 = scmp.eq.s32.totalorder %s40, 0
      %p177 = por %p175, %p176
      %p178 = scmp.ne.s32.totalorder %s164, %s165
      %p179 = scmp.eq.s32.totalorder %s41, 3
      %p180 = por %p178, %p179
      %p182 = scmp.ne.s32.totalorder %s165, %s181
      %p183 = scmp.eq.s32.totalorder %s41, 0
      %p184 = por %p182, %p183
      %s185 = ssub.s32 %s43, %s50
      %p186 = scmp.eq.s32.totalorder %s185, 0
      %s188 = sadd.s32 %s187, 1
      %s189 = scalar_select %p186, %s187, %s188
      %p192 = pneg %p186
      %p193 = scmp.eq.s32.totalorder %s35, 3
      %p194 = por %p192, %p193
      %p195 = scmp.ne.s32.totalorder %s187, %s190
      %p196 = scmp.eq.s32.totalorder %s35, 0
      %p197 = por %p195, %p196
      %p198 = scmp.ne.s32.totalorder %s187, %s190
      %p199 = scmp.eq.s32.totalorder %s40, 3
      %p200 = por %p198, %p199
      %p201 = scmp.ne.s32.totalorder %s190, %s191
      %p202 = scmp.eq.s32.totalorder %s40, 0
      %p203 = por %p201, %p202
      %p204 = scmp.ne.s32.totalorder %s190, %s191
      %p205 = scmp.eq.s32.totalorder %s41, 3
      %p206 = por %p204, %p205
      %p208 = scmp.ne.s32.totalorder %s191, %s207
      %p209 = scmp.eq.s32.totalorder %s41, 0
      %p210 = por %p208, %p209
      %s211 = ssub.s32 %s43, %s50
      %p212 = scmp.eq.s32.totalorder %s211, 0
      %s214 = sadd.s32 %s213, 1
      %s215 = scalar_select %p212, %s213, %s214
      %p218 = pneg %p212
      %p219 = scmp.eq.s32.totalorder %s35, 3
      %p220 = por %p218, %p219
      %p221 = scmp.ne.s32.totalorder %s213, %s216
      %p222 = scmp.eq.s32.totalorder %s35, 0
      %p223 = por %p221, %p222
      %p224 = scmp.ne.s32.totalorder %s213, %s216
      %p225 = scmp.eq.s32.totalorder %s40, 3
      %p226 = por %p224, %p225
      %p227 = scmp.ne.s32.totalorder %s216, %s217
      %p228 = scmp.eq.s32.totalorder %s40, 0
      %p229 = por %p227, %p228
      %p230 = scmp.ne.s32.totalorder %s216, %s217
      %p231 = scmp.eq.s32.totalorder %s41, 3
      %p232 = por %p230, %p231
      %p234 = scmp.ne.s32.totalorder %s217, %s233
      %p235 = scmp.eq.s32.totalorder %s41, 0
      %p236 = por %p234, %p235
      %s237 = ssub.s32 %s43, %s50
      %p238 = scmp.eq.s32.totalorder %s237, 0
      %s240 = sadd.s32 %s239, 1
      %s241 = scalar_select %p238, %s239, %s240
      %p244 = pneg %p238
      %p245 = scmp.eq.s32.totalorder %s35, 3
      %p246 = por %p244, %p245
      %p247 = scmp.ne.s32.totalorder %s239, %s242
      %p248 = scmp.eq.s32.totalorder %s35, 0
      %p249 = por %p247, %p248
      %p250 = scmp.ne.s32.totalorder %s239, %s242
      %p251 = scmp.eq.s32.totalorder %s40, 3
      %p252 = por %p250, %p251
      %p253 = scmp.ne.s32.totalorder %s242, %s243
      %p254 = scmp.eq.s32.totalorder %s40, 0
      %p255 = por %p253, %p254
      %p256 = scmp.ne.s32.totalorder %s242, %s243
      %p257 = scmp.eq.s32.totalorder %s41, 3
      %p258 = por %p256, %p257
      %p260 = scmp.ne.s32.totalorder %s243, %s259
      %p261 = scmp.eq.s32.totalorder %s41, 0
      %p262 = por %p260, %p261
      %s263 = ssub.s32 %s43, %s50
      %p264 = scmp.eq.s32.totalorder %s263, 0
      %s266 = sadd.s32 %s265, 1
      %s267 = scalar_select %p264, %s265, %s266
      %p270 = pneg %p264
      %p271 = scmp.eq.s32.totalorder %s35, 3
      %p272 = por %p270, %p271
      %p273 = scmp.ne.s32.totalorder %s265, %s268
      %p274 = scmp.eq.s32.totalorder %s35, 0
      %p275 = por %p273, %p274
      %p276 = scmp.ne.s32.totalorder %s265, %s268
      %p277 = scmp.eq.s32.totalorder %s40, 3
      %p278 = por %p276, %p277
      %p279 = scmp.ne.s32.totalorder %s268, %s269
      %p280 = scmp.eq.s32.totalorder %s40, 0
      %p281 = por %p279, %p280
      %p282 = scmp.ne.s32.totalorder %s268, %s269
      %p283 = scmp.eq.s32.totalorder %s41, 3
      %p284 = por %p282, %p283
      %p286 = scmp.ne.s32.totalorder %s269, %s285
      %p287 = scmp.eq.s32.totalorder %s41, 0
      %p288 = por %p286, %p287
      %s289 = ssub.s32 %s43, %s50
      %p290 = scmp.eq.s32.totalorder %s289, 0
      %s292 = sadd.s32 %s291, 1
      %s293 = scalar_select %p290, %s291, %s292
      %p296 = pneg %p290
      %p297 = scmp.eq.s32.totalorder %s35, 3
      %p298 = por %p296, %p297
      %p299 = scmp.ne.s32.totalorder %s291, %s294
      %p300 = scmp.eq.s32.totalorder %s35, 0
      %p301 = por %p299, %p300
      %p302 = scmp.ne.s32.totalorder %s291, %s294
      %p303 = scmp.eq.s32.totalorder %s40, 3
      %p304 = por %p302, %p303
      %p305 = scmp.ne.s32.totalorder %s294, %s295
      %p306 = scmp.eq.s32.totalorder %s40, 0
      %p307 = por %p305, %p306
      %p308 = scmp.ne.s32.totalorder %s294, %s295
      %p309 = scmp.eq.s32.totalorder %s41, 3
      %p310 = por %p308, %p309
      %p312 = scmp.ne.s32.totalorder %s295, %s311
      %p313 = scmp.eq.s32.totalorder %s41, 0
      %p314 = por %p312, %p313
      %s315 = ssub.s32 %s43, %s50
      %p316 = scmp.eq.s32.totalorder %s315, 0
      %s318 = sadd.s32 %s317, 1
      %s319 = scalar_select %p316, %s317, %s318
      %p322 = pneg %p316
      %p323 = scmp.eq.s32.totalorder %s35, 3
      %p324 = por %p322, %p323
      %p325 = scmp.ne.s32.totalorder %s317, %s320
      %p326 = scmp.eq.s32.totalorder %s35, 0
      %p327 = por %p325, %p326
      %p328 = scmp.ne.s32.totalorder %s317, %s320
      %p329 = scmp.eq.s32.totalorder %s40, 3
      %p330 = por %p328, %p329
      %p331 = scmp.ne.s32.totalorder %s320, %s321
      %p332 = scmp.eq.s32.totalorder %s40, 0
      %p333 = por %p331, %p332
      %p334 = scmp.ne.s32.totalorder %s320, %s321
      %p335 = scmp.eq.s32.totalorder %s41, 3
      %p336 = por %p334, %p335
      %p338 = scmp.ne.s32.totalorder %s321, %s337
      %p339 = scmp.eq.s32.totalorder %s41, 0
      %p340 = por %p338, %p339
      %s341 = ssub.s32 %s43, %s50
      %p342 = scmp.eq.s32.totalorder %s341, 0
      %s344 = sadd.s32 %s343, 1
      %s345 = scalar_select %p342, %s343, %s344
      %p348 = pneg %p342
      %p349 = scmp.eq.s32.totalorder %s35, 3
      %p350 = por %p348, %p349
      %p351 = scmp.ne.s32.totalorder %s343, %s346
      %p352 = scmp.eq.s32.totalorder %s35, 0
      %p353 = por %p351, %p352
      %p354 = scmp.ne.s32.totalorder %s343, %s346
      %p355 = scmp.eq.s32.totalorder %s40, 3
      %p356 = por %p354, %p355
      %p357 = scmp.ne.s32.totalorder %s346, %s347
      %p358 = scmp.eq.s32.totalorder %s40, 0
      %p359 = por %p357, %p358
      %p360 = scmp.ne.s32.totalorder %s346, %s347
      %p361 = scmp.eq.s32.totalorder %s41, 3
      %p362 = por %p360, %p361
      %p364 = scmp.ne.s32.totalorder %s347, %s363
      %p365 = scmp.eq.s32.totalorder %s41, 0
      %p366 = por %p364, %p365
      %s368 = sadd.s32 %s367, 1
      %p371 = scmp.eq.s32.totalorder %s35, 3
      %p372 = scmp.ne.s32.totalorder %s367, %s369
      %p373 = scmp.eq.s32.totalorder %s35, 0
      %p374 = por %p372, %p373
      %p375 = scmp.ne.s32.totalorder %s367, %s369
      %p376 = scmp.eq.s32.totalorder %s40, 3
      %p377 = por %p375, %p376
      %p378 = scmp.ne.s32.totalorder %s369, %s370
      %p379 = scmp.eq.s32.totalorder %s40, 0
      %p380 = por %p378, %p379
      %p381 = scmp.ne.s32.totalorder %s369, %s370
      %p382 = scmp.eq.s32.totalorder %s41, 3
      %p383 = por %p381, %p382
      %p385 = scmp.ne.s32.totalorder %s370, %s384
      %p386 = scmp.eq.s32.totalorder %s41, 0
      %p387 = por %p385, %p386
      %s389 = sadd.s32 %s388, 1
      %p392 = scmp.eq.s32.totalorder %s35, 3
      %p393 = scmp.ne.s32.totalorder %s388, %s390
      %p394 = scmp.eq.s32.totalorder %s35, 0
      %p395 = por %p393, %p394
      %p396 = scmp.ne.s32.totalorder %s388, %s390
      %p397 = scmp.eq.s32.totalorder %s40, 3
      %p398 = por %p396, %p397
      %p399 = scmp.ne.s32.totalorder %s390, %s391
      %p400 = scmp.eq.s32.totalorder %s40, 0
      %p401 = por %p399, %p400
      %p402 = scmp.ne.s32.totalorder %s390, %s391
      %p403 = scmp.eq.s32.totalorder %s41, 3
      %p404 = por %p402, %p403
      %p406 = scmp.ne.s32.totalorder %s391, %s405
      %p407 = scmp.eq.s32.totalorder %s41, 0
      %p408 = por %p406, %p407
      %s410 = sadd.s32 %s409, 1
      %p413 = scmp.eq.s32.totalorder %s35, 3
      %p414 = scmp.ne.s32.totalorder %s409, %s411
      %p415 = scmp.eq.s32.totalorder %s35, 0
      %p416 = por %p414, %p415
      %p417 = scmp.ne.s32.totalorder %s409, %s411
      %p418 = scmp.eq.s32.totalorder %s40, 3
      %p419 = por %p417, %p418
      %p420 = scmp.ne.s32.totalorder %s411, %s412
      %p421 = scmp.eq.s32.totalorder %s40, 0
      %p422 = por %p420, %p421
      %p423 = scmp.ne.s32.totalorder %s411, %s412
      %p424 = scmp.eq.s32.totalorder %s41, 3
      %p425 = por %p423, %p424
      %p427 = scmp.ne.s32.totalorder %s412, %s426
      %p428 = scmp.eq.s32.totalorder %s41, 0
      %p429 = por %p427, %p428
      %s431 = sadd.s32 %s430, 1
      %p434 = scmp.eq.s32.totalorder %s35, 3
      %p435 = scmp.ne.s32.totalorder %s430, %s432
      %p436 = scmp.eq.s32.totalorder %s35, 0
      %p437 = por %p435, %p436
      %p438 = scmp.ne.s32.totalorder %s430, %s432
      %p439 = scmp.eq.s32.totalorder %s40, 3
      %p440 = por %p438, %p439
      %p441 = scmp.ne.s32.totalorder %s432, %s433
      %p442 = scmp.eq.s32.totalorder %s40, 0
      %p443 = por %p441, %p442
      %p444 = scmp.ne.s32.totalorder %s432, %s433
      %p445 = scmp.eq.s32.totalorder %s41, 3
      %p446 = por %p444, %p445
      %p448 = scmp.ne.s32.totalorder %s433, %s447
      %p449 = scmp.eq.s32.totalorder %s41, 0
      %p450 = por %p448, %p449
      %s451 = ssub.s32 %s42, %s54
      %p452 = scmp.eq.s32.totalorder %s451, 0
      %s454 = sadd.s32 %s453, 1
      %s455 = scalar_select %p452, %s453, %s454
      %p458 = pneg %p452
      %p459 = scmp.eq.s32.totalorder %s35, 3
      %p460 = por %p458, %p459
      %p461 = scmp.ne.s32.totalorder %s453, %s456
      %p462 = scmp.eq.s32.totalorder %s35, 0
      %p463 = por %p461, %p462
      %p464 = scmp.ne.s32.totalorder %s453, %s456
      %p465 = scmp.eq.s32.totalorder %s40, 3
      %p466 = por %p464, %p465
      %p467 = scmp.ne.s32.totalorder %s456, %s457
      %p468 = scmp.eq.s32.totalorder %s40, 0
      %p469 = por %p467, %p468
      %p470 = scmp.ne.s32.totalorder %s456, %s457
      %p471 = scmp.eq.s32.totalorder %s41, 3
      %p472 = por %p470, %p471
      %p474 = scmp.ne.s32.totalorder %s457, %s473
      %p475 = scmp.eq.s32.totalorder %s41, 0
      %p476 = por %p474, %p475
      %p477 = scmp.le.s32.totalorder 1, %s35
      %p478 = scmp.lt.s32.totalorder %s35, 5
      %p479 = pnand %p477, %p478
      %p480 = pneg %p479
      // Predicated region
      $region9: #{vit_decoder_forward.1} parent=5 // pred_check
        _
      $region10: #{vit_decoder_forward.1} parent=5 // pred_check_branch
        %482 = sbr.rel (%p479) target = $region12
      $region11: #{vit_decoder_forward.1} parent=5 // pred_region
        %s483 = ssub.s32 %s35, 1
        // Predicated region
        $region13: #{vit_decoder_forward.1} parent=11 // pred_check
          %p484 = pneg %p380
        $region14: #{vit_decoder_forward.1} parent=11 // pred_check_branch
          %486 = sbr.rel (%p484) target = $region16
        $region15: #{vit_decoder_forward.1} parent=11 // pred_region
          _
        $region16: #{vit_decoder_forward.1} parent=11 // pred_fallthru
          _
        // Predicated region
        $region17: #{vit_decoder_forward.1} parent=11 // pred_check
          %p487 = pneg %p401
        $region18: #{vit_decoder_forward.1} parent=11 // pred_check_branch
          %489 = sbr.rel (%p487) target = $region20
        $region19: #{vit_decoder_forward.1} parent=11 // pred_region
          _
        $region20: #{vit_decoder_forward.1} parent=11 // pred_fallthru
          _
        // Predicated region
        $region21: #{vit_decoder_forward.1} parent=11 // pred_check
          %p490 = pneg %p422
        $region22: #{vit_decoder_forward.1} parent=11 // pred_check_branch
          %492 = sbr.rel (%p490) target = $region24
        $region23: #{vit_decoder_forward.1} parent=11 // pred_region
          %494 = vsyncadd [#allocation14], 0
          %s495 = sshll.u32 %s14, 4
          %s496 = int_to_ptr.hbm [resolvable:$true] %s495
          %s497 = sshll.u32 [#allocation13], 4
          %s498 = int_to_ptr.vmem [resolvable:$true] %s497
          %503 = dma.hbm_to_vmem [thread:$0]  %s496, 256, %s498, [#allocation14], 64, 64, 4
        $region24: #{vit_decoder_forward.1} parent=11 // pred_fallthru
          _
        // Predicated region
        $region25: #{vit_decoder_forward.1} parent=11 // pred_check
          %p504 = pneg %p443
        $region26: #{vit_decoder_forward.1} parent=11 // pred_check_branch
          %506 = sbr.rel (%p504) target = $region28
        $region27: #{vit_decoder_forward.1} parent=11 // pred_region
          %508 = vsyncadd [#allocation14], 0
          %s510 = sshll.u32 %s15, 4
          %s511 = int_to_ptr.hbm [resolvable:$true] %s510
          %s512 = sshll.u32 [#allocation15], 4
          %s513 = int_to_ptr.vmem [resolvable:$true] %s512
          %515 = dma.hbm_to_vmem [thread:$0]  %s511, 16, %s513, [#allocation14]
        $region28: #{vit_decoder_forward.1} parent=11 // pred_fallthru
          _
      $region12: #{vit_decoder_forward.1} parent=5 // pred_fallthru
        _
      %p516 = scmp.lt.s32.totalorder %s35, 4
      // Predicated region
      $region29: #{vit_decoder_forward.1} parent=5 // pred_check
        %p517 = pneg %p516
      $region30: #{vit_decoder_forward.1} parent=5 // pred_check_branch
        %519 = sbr.rel (%p517) target = $region32
      $region31: #{vit_decoder_forward.1} parent=5 // pred_region
        // Predicated region
        $region33: #{vit_decoder_forward.1} parent=31 // pred_check
          %p520 = pneg %p67
        $region34: #{vit_decoder_forward.1} parent=31 // pred_check_branch
          %522 = sbr.rel (%p520) target = $region36
        $region35: #{vit_decoder_forward.1} parent=31 // pred_region
          %s523 = smul.u32 2, %s42
          %p524 = scmp.lt.s32.totalorder %s523, 3
          %s525 = scalar_select %p524, %s523, 3
          %s526 = smul.addr %s525, 2
          %s527 = smul.addr %s526, 8
          %s528 = scalar_lea.vmem %s0, %s527
          %s529 = smul.u32 2, %s42
        $region36: #{vit_decoder_forward.1} parent=31 // pred_fallthru
          _
        // Predicated region
        $region37: #{vit_decoder_forward.1} parent=31 // pred_check
          %p530 = pneg %p93
        $region38: #{vit_decoder_forward.1} parent=31 // pred_check_branch
          %532 = sbr.rel (%p530) target = $region40
        $region39: #{vit_decoder_forward.1} parent=31 // pred_region
          %p533 = scmp.lt.s32.totalorder %s43, 1
          %s534 = scalar_select %p533, %s43, 1
          %s535 = scalar_lea.vmem %s1, %s534
        $region40: #{vit_decoder_forward.1} parent=31 // pred_fallthru
          _
        // Predicated region
        $region41: #{vit_decoder_forward.1} parent=31 // pred_check
          %p536 = pneg %p119
        $region42: #{vit_decoder_forward.1} parent=31 // pred_check_branch
          %538 = sbr.rel (%p536) target = $region44
        $region43: #{vit_decoder_forward.1} parent=31 // pred_region
          %s539 = sand.u32 %s109, 1
          %s540 = scalar_lea.sflag [#allocation5], %s539
          %s541 = sand.u32 %s109, 1
          %s542 = scalar_lea.vmem [#allocation4], %s541
          %544 = vsyncadd %s540, 0
          %s545 = scalar_lea.hbm %s2, %s43
          %s547 = sshll.u32 %s545, 4
          %s548 = int_to_ptr.hbm [resolvable:$true] %s547
          %s549 = sshll.u32 %s542, 4
          %s550 = int_to_ptr.vmem [resolvable:$true] %s549
          %552 = dma.hbm_to_vmem [thread:$0]  %s548, 16, %s550, %s540
        $region44: #{vit_decoder_forward.1} parent=31 // pred_fallthru
          _
        // Predicated region
        $region45: #{vit_decoder_forward.1} parent=31 // pred_check
          %p553 = pneg %p145
        $region46: #{vit_decoder_forward.1} parent=31 // pred_check_branch
          %555 = sbr.rel (%p553) target = $region48
        $region47: #{vit_decoder_forward.1} parent=31 // pred_region
          %p556 = scmp.lt.s32.totalorder %s43, 1
          %s557 = scalar_select %p556, %s43, 1
          %s558 = smul.addr %s557, 4
          %s559 = smul.addr %s558, 4
          %s560 = scalar_lea.vmem %s3, %s559
        $region48: #{vit_decoder_forward.1} parent=31 // pred_fallthru
          _
        // Predicated region
        $region49: #{vit_decoder_forward.1} parent=31 // pred_check
          %p561 = pneg %p171
        $region50: #{vit_decoder_forward.1} parent=31 // pred_check_branch
          %563 = sbr.rel (%p561) target = $region52
        $region51: #{vit_decoder_forward.1} parent=31 // pred_region
          %p564 = scmp.lt.s32.totalorder %s43, 1
          %s565 = scalar_select %p564, %s43, 1
          %s566 = smul.addr %s565, 4
          %s567 = smul.addr %s566, 4
          %s568 = scalar_lea.vmem %s4, %s567
        $region52: #{vit_decoder_forward.1} parent=31 // pred_fallthru
          _
        // Predicated region
        $region53: #{vit_decoder_forward.1} parent=31 // pred_check
          %p569 = pneg %p197
        $region54: #{vit_decoder_forward.1} parent=31 // pred_check_branch
          %571 = sbr.rel (%p569) target = $region56
        $region55: #{vit_decoder_forward.1} parent=31 // pred_region
          %s572 = sand.u32 %s35, 1
          %s573 = scalar_lea.sflag [#allocation8], %s572
          %s574 = sand.u32 %s187, 1
          %s575 = scalar_lea.vmem [#allocation7], %s574
          %577 = vsyncadd %s573, 0
          %s578 = scalar_lea.hbm %s5, %s43
          %s580 = sshll.u32 %s578, 4
          %s581 = int_to_ptr.hbm [resolvable:$true] %s580
          %s582 = sshll.u32 %s575, 4
          %s583 = int_to_ptr.vmem [resolvable:$true] %s582
          %585 = dma.hbm_to_vmem [thread:$0]  %s581, 16, %s583, %s573
        $region56: #{vit_decoder_forward.1} parent=31 // pred_fallthru
          _
        // Predicated region
        $region57: #{vit_decoder_forward.1} parent=31 // pred_check
          %p586 = pneg %p223
        $region58: #{vit_decoder_forward.1} parent=31 // pred_check_branch
          %588 = sbr.rel (%p586) target = $region60
        $region59: #{vit_decoder_forward.1} parent=31 // pred_region
          %p589 = scmp.lt.s32.totalorder %s43, 1
          %s590 = scalar_select %p589, %s43, 1
          %s591 = scalar_lea.vmem %s6, %s590
        $region60: #{vit_decoder_forward.1} parent=31 // pred_fallthru
          _
        // Predicated region
        $region61: #{vit_decoder_forward.1} parent=31 // pred_check
          %p592 = pneg %p249
        $region62: #{vit_decoder_forward.1} parent=31 // pred_check_branch
          %594 = sbr.rel (%p592) target = $region64
        $region63: #{vit_decoder_forward.1} parent=31 // pred_region
          %s595 = sand.u32 %s35, 1
          %s596 = scalar_lea.sflag [#allocation8], %s595
          %s597 = sand.u32 %s239, 1
          %s598 = scalar_lea.vmem [#allocation9], %s597
          %600 = vsyncadd %s596, 0
          %s601 = scalar_lea.hbm %s7, %s43
          %s603 = sshll.u32 %s601, 4
          %s604 = int_to_ptr.hbm [resolvable:$true] %s603
          %s605 = sshll.u32 %s598, 4
          %s606 = int_to_ptr.vmem [resolvable:$true] %s605
          %608 = dma.hbm_to_vmem [thread:$0]  %s604, 16, %s606, %s596
        $region64: #{vit_decoder_forward.1} parent=31 // pred_fallthru
          _
        // Predicated region
        $region65: #{vit_decoder_forward.1} parent=31 // pred_check
          %p609 = pneg %p275
        $region66: #{vit_decoder_forward.1} parent=31 // pred_check_branch
          %611 = sbr.rel (%p609) target = $region68
        $region67: #{vit_decoder_forward.1} parent=31 // pred_region
          %p612 = scmp.lt.s32.totalorder %s43, 1
          %s613 = scalar_select %p612, %s43, 1
          %s614 = smul.addr %s613, 4
          %s615 = smul.addr %s614, 4
          %s616 = scalar_lea.vmem %s8, %s615
        $region68: #{vit_decoder_forward.1} parent=31 // pred_fallthru
          _
        // Predicated region
        $region69: #{vit_decoder_forward.1} parent=31 // pred_check
          %p617 = pneg %p301
        $region70: #{vit_decoder_forward.1} parent=31 // pred_check_branch
          %619 = sbr.rel (%p617) target = $region72
        $region71: #{vit_decoder_forward.1} parent=31 // pred_region
          %s620 = sand.u32 %s35, 1
          %s621 = scalar_lea.sflag [#allocation11], %s620
          %s622 = sand.u32 %s291, 1
          %s623 = scalar_lea.vmem [#allocation10], %s622
          %625 = vsyncadd %s621, 0
          %s626 = scalar_lea.hbm %s9, %s43
          %s628 = sshll.u32 %s626, 4
          %s629 = int_to_ptr.hbm [resolvable:$true] %s628
          %s630 = sshll.u32 %s623, 4
          %s631 = int_to_ptr.vmem [resolvable:$true] %s630
          %633 = dma.hbm_to_vmem [thread:$0]  %s629, 16, %s631, %s621
        $region72: #{vit_decoder_forward.1} parent=31 // pred_fallthru
          _
        // Predicated region
        $region73: #{vit_decoder_forward.1} parent=31 // pred_check
          %p634 = pneg %p327
        $region74: #{vit_decoder_forward.1} parent=31 // pred_check_branch
          %636 = sbr.rel (%p634) target = $region76
        $region75: #{vit_decoder_forward.1} parent=31 // pred_region
          %p637 = scmp.lt.s32.totalorder %s43, 1
          %s638 = scalar_select %p637, %s43, 1
          %s639 = smul.addr %s638, 16
          %s640 = smul.addr %s639, 4
          %s641 = scalar_lea.vmem %s10, %s640
        $region76: #{vit_decoder_forward.1} parent=31 // pred_fallthru
          _
        // Predicated region
        $region77: #{vit_decoder_forward.1} parent=31 // pred_check
          %p642 = pneg %p353
        $region78: #{vit_decoder_forward.1} parent=31 // pred_check_branch
          %644 = sbr.rel (%p642) target = $region80
        $region79: #{vit_decoder_forward.1} parent=31 // pred_region
          %s645 = sand.u32 %s35, 1
          %s646 = scalar_lea.sflag [#allocation11], %s645
          %s647 = sand.u32 %s343, 1
          %s648 = scalar_lea.vmem [#allocation12], %s647
          %650 = vsyncadd %s646, 0
          %s651 = scalar_lea.hbm %s11, %s43
          %s653 = sshll.u32 %s651, 4
          %s654 = int_to_ptr.hbm [resolvable:$true] %s653
          %s655 = sshll.u32 %s648, 4
          %s656 = int_to_ptr.vmem [resolvable:$true] %s655
          %658 = dma.hbm_to_vmem [thread:$0]  %s654, 16, %s656, %s646
        $region80: #{vit_decoder_forward.1} parent=31 // pred_fallthru
          _
      $region32: #{vit_decoder_forward.1} parent=5 // pred_fallthru
        _
      %p659 = scmp.le.s32.totalorder 1, %s35
      %p660 = scmp.lt.s32.totalorder %s35, 5
      %p661 = pnand %p659, %p660
      %p662 = pneg %p661
      // Predicated region
      $region81: #{vit_decoder_forward.1} parent=5 // pred_check
        _
      $region82: #{vit_decoder_forward.1} parent=5 // pred_check_branch
        %664 = sbr.rel (%p661) target = $region84
      $region83: #{vit_decoder_forward.1} parent=5 // pred_region
        %s665 = ssub.s32 %s35, 1
        %s666 = sand.u32 %s112, 1
        %s667 = scalar_lea.sflag [#allocation5], %s666
        %s668 = sand.u32 %s112, 1
        %s669 = scalar_lea.vmem [#allocation4], %s668
        // Predicated region
        $region85: #{vit_decoder_forward.1} parent=83 // pred_check
          %p670 = pneg %p125
        $region86: #{vit_decoder_forward.1} parent=83 // pred_check_branch
          %672 = sbr.rel (%p670) target = $region88
        $region87: #{vit_decoder_forward.1} parent=83 // pred_region
          %674 = dma.done %s667, 16
        $region88: #{vit_decoder_forward.1} parent=83 // pred_fallthru
          _
        %s675 = sand.u32 %s40, 1
        %s676 = scalar_lea.sflag [#allocation8], %s675
        %s677 = sand.u32 %s190, 1
        %s678 = scalar_lea.vmem [#allocation7], %s677
        // Predicated region
        $region89: #{vit_decoder_forward.1} parent=83 // pred_check
          %p679 = pneg %p203
        $region90: #{vit_decoder_forward.1} parent=83 // pred_check_branch
          %681 = sbr.rel (%p679) target = $region92
        $region91: #{vit_decoder_forward.1} parent=83 // pred_region
          %683 = dma.done %s676, 16
        $region92: #{vit_decoder_forward.1} parent=83 // pred_fallthru
          _
        %s684 = sand.u32 %s40, 1
        %s685 = scalar_lea.sflag [#allocation8], %s684
        %s686 = sand.u32 %s242, 1
        %s687 = scalar_lea.vmem [#allocation9], %s686
        // Predicated region
        $region93: #{vit_decoder_forward.1} parent=83 // pred_check
          %p688 = pneg %p255
        $region94: #{vit_decoder_forward.1} parent=83 // pred_check_branch
          %690 = sbr.rel (%p688) target = $region96
        $region95: #{vit_decoder_forward.1} parent=83 // pred_region
          %692 = dma.done %s685, 16
        $region96: #{vit_decoder_forward.1} parent=83 // pred_fallthru
          _
        %s693 = sand.u32 %s40, 1
        %s694 = scalar_lea.sflag [#allocation11], %s693
        %s695 = sand.u32 %s294, 1
        %s696 = scalar_lea.vmem [#allocation10], %s695
        // Predicated region
        $region97: #{vit_decoder_forward.1} parent=83 // pred_check
          %p697 = pneg %p307
        $region98: #{vit_decoder_forward.1} parent=83 // pred_check_branch
          %699 = sbr.rel (%p697) target = $region100
        $region99: #{vit_decoder_forward.1} parent=83 // pred_region
          %701 = dma.done %s694, 16
        $region100: #{vit_decoder_forward.1} parent=83 // pred_fallthru
          _
        %s702 = sand.u32 %s40, 1
        %s703 = scalar_lea.sflag [#allocation11], %s702
        %s704 = sand.u32 %s346, 1
        %s705 = scalar_lea.vmem [#allocation12], %s704
        // Predicated region
        $region101: #{vit_decoder_forward.1} parent=83 // pred_check
          %p706 = pneg %p359
        $region102: #{vit_decoder_forward.1} parent=83 // pred_check_branch
          %708 = sbr.rel (%p706) target = $region104
        $region103: #{vit_decoder_forward.1} parent=83 // pred_region
          %710 = dma.done %s703, 16
        $region104: #{vit_decoder_forward.1} parent=83 // pred_fallthru
          _
        // Predicated region
        $region105: #{vit_decoder_forward.1} parent=83 // pred_check
          %p711 = pneg %p422
        $region106: #{vit_decoder_forward.1} parent=83 // pred_check_branch
          %713 = sbr.rel (%p711) target = $region108
        $region107: #{vit_decoder_forward.1} parent=83 // pred_region
          %715 = dma.done [#allocation14], 256
        $region108: #{vit_decoder_forward.1} parent=83 // pred_fallthru
          _
        // Predicated region
        $region109: #{vit_decoder_forward.1} parent=83 // pred_check
          %p716 = pneg %p443
        $region110: #{vit_decoder_forward.1} parent=83 // pred_check_branch
          %718 = sbr.rel (%p716) target = $region112
        $region111: #{vit_decoder_forward.1} parent=83 // pred_region
          %720 = dma.done [#allocation14], 16
        $region112: #{vit_decoder_forward.1} parent=83 // pred_fallthru
          _
        %s721 = smul.u32 2, %s44
        %p722 = scmp.lt.s32.totalorder %s721, 3
        %s723 = scalar_select %p722, %s721, 3
        %s724 = smul.addr %s723, 2
        %s725 = smul.addr %s724, 8
        %s726 = scalar_lea.vmem %s0, %s725
        %p727 = pneg %p73
        %p728 = pneg %p70
        %p729 = scmp.lt.s32.totalorder %s45, 1
        %s730 = scalar_select %p729, %s45, 1
        %s731 = scalar_lea.vmem %s1, %s730
        %p732 = pneg %p99
        %p733 = pneg %p96
        %s734 = sand.u32 %s112, 1
        %s735 = scalar_lea.sflag [#allocation5], %s734
        %s736 = sand.u32 %s112, 1
        %s737 = scalar_lea.vmem [#allocation4], %s736
        %p738 = pneg %p125
        %p739 = pneg %p122
        %p740 = scmp.lt.s32.totalorder %s45, 1
        %s741 = scalar_select %p740, %s45, 1
        %s742 = smul.addr %s741, 4
        %s743 = smul.addr %s742, 4
        %s744 = scalar_lea.vmem %s3, %s743
        %p745 = pneg %p151
        %p746 = pneg %p148
        %p747 = scmp.lt.s32.totalorder %s45, 1
        %s748 = scalar_select %p747, %s45, 1
        %s749 = smul.addr %s748, 4
        %s750 = smul.addr %s749, 4
        %s751 = scalar_lea.vmem %s4, %s750
        %p752 = pneg %p177
        %p753 = pneg %p174
        %s754 = sand.u32 %s40, 1
        %s755 = scalar_lea.sflag [#allocation8], %s754
        %s756 = sand.u32 %s190, 1
        %s757 = scalar_lea.vmem [#allocation7], %s756
        %p758 = pneg %p203
        %p759 = pneg %p200
        %p760 = scmp.lt.s32.totalorder %s45, 1
        %s761 = scalar_select %p760, %s45, 1
        %s762 = scalar_lea.vmem %s6, %s761
        %p763 = pneg %p229
        %p764 = pneg %p226
        %s765 = sand.u32 %s40, 1
        %s766 = scalar_lea.sflag [#allocation8], %s765
        %s767 = sand.u32 %s242, 1
        %s768 = scalar_lea.vmem [#allocation9], %s767
        %p769 = pneg %p255
        %p770 = pneg %p252
        %p771 = scmp.lt.s32.totalorder %s45, 1
        %s772 = scalar_select %p771, %s45, 1
        %s773 = smul.addr %s772, 4
        %s774 = smul.addr %s773, 4
        %s775 = scalar_lea.vmem %s8, %s774
        %p776 = pneg %p281
        %p777 = pneg %p278
        %s778 = sand.u32 %s40, 1
        %s779 = scalar_lea.sflag [#allocation11], %s778
        %s780 = sand.u32 %s294, 1
        %s781 = scalar_lea.vmem [#allocation10], %s780
        %p782 = pneg %p307
        %p783 = pneg %p304
        %p784 = scmp.lt.s32.totalorder %s45, 1
        %s785 = scalar_select %p784, %s45, 1
        %s786 = smul.addr %s785, 16
        %s787 = smul.addr %s786, 4
        %s788 = scalar_lea.vmem %s10, %s787
        %p789 = pneg %p333
        %p790 = pneg %p330
        %s791 = sand.u32 %s40, 1
        %s792 = scalar_lea.sflag [#allocation11], %s791
        %s793 = sand.u32 %s346, 1
        %s794 = scalar_lea.vmem [#allocation12], %s793
        %p795 = pneg %p359
        %p796 = pneg %p356
        %p797 = pneg %p380
        %p798 = pneg %p377
        %p799 = pneg %p401
        %p800 = pneg %p398
        %p801 = pneg %p422
        %p802 = pneg %p419
        %p803 = pneg %p443
        %p804 = pneg %p440
        %p805 = pneg %p469
        %p806 = pneg %p466
        %s807 = sand.u32 %s456, 1
        %s808 = scalar_lea.sflag [#allocation6], %s807
        %s809 = sand.u32 %s456, 1
        %s810 = smul.addr %s809, 16
        %s811 = scalar_lea.vmem [#allocation16], %s810
        %s812 = smul.u32 2, %s44
        %p813 = scmp.lt.s32.totalorder %s812, 3
        %s814 = scalar_select %p813, %s812, 3
        %s815 = smul.addr %s814, 2
        %s816 = smul.addr %s815, 8
        %s817 = scalar_lea.vmem %s0, %s816
        %s818 = smul.u32 2, %s44
        %p819 = scmp.lt.s32.totalorder %s45, 1
        %s820 = scalar_select %p819, %s45, 1
        %s821 = scalar_lea.vmem %s1, %s820
        %p822 = scmp.lt.s32.totalorder %s45, 1
        %s823 = scalar_select %p822, %s45, 1
        %s824 = smul.addr %s823, 4
        %s825 = smul.addr %s824, 4
        %s826 = scalar_lea.vmem %s3, %s825
        %p827 = scmp.lt.s32.totalorder %s45, 1
        %s828 = scalar_select %p827, %s45, 1
        %s829 = smul.addr %s828, 4
        %s830 = smul.addr %s829, 4
        %s831 = scalar_lea.vmem %s4, %s830
        %p832 = scmp.lt.s32.totalorder %s45, 1
        %s833 = scalar_select %p832, %s45, 1
        %s834 = scalar_lea.vmem %s6, %s833
        %p835 = scmp.lt.s32.totalorder %s45, 1
        %s836 = scalar_select %p835, %s45, 1
        %s837 = smul.addr %s836, 4
        %s838 = smul.addr %s837, 4
        %s839 = scalar_lea.vmem %s8, %s838
        %p840 = scmp.lt.s32.totalorder %s45, 1
        %s841 = scalar_select %p840, %s45, 1
        %s842 = smul.addr %s841, 16
        %s843 = smul.addr %s842, 4
        %s844 = scalar_lea.vmem %s10, %s843
        %s845 = smul.u32 2, %s44
        %p847 = scmp.eq.s32.totalorder %s45, 0
        // Predicated region
        $region113: #{vit_decoder_forward.1} parent=83 // pred_check
          %p848 = pneg %p847
        $region114: #{vit_decoder_forward.1} parent=83 // pred_check_branch
          %850 = sbr.rel (%p848) target = $region116
        $region115: #{vit_decoder_forward.1} parent=83 // pred_region
          %v851 = vld [vmem:[%s817] sm:$0xff]
          %v852 = vld [vmem:[%s817 + $0x8] sm:$0xff]
          %v853 = vld [vmem:[%s817 + $0x10] sm:$0xff]
          %v854 = vld [vmem:[%s817 + $0x18] sm:$0xff]
          %vm855 = vcmask 261120
          %856 = vst.msk [vmem:[#allocation2] sm:$0xff] %vm855, %v851
          %857 = vst.msk [vmem:[#allocation2 + $0x8] sm:$0xff] %vm855, %v852
          %858 = vst.msk [vmem:[#allocation2 + $0x10] sm:$0xff] %vm855, %v853
          %859 = vst.msk [vmem:[#allocation2 + $0x18] sm:$0xff] %vm855, %v854
        $region116: #{vit_decoder_forward.1} parent=83 // pred_fallthru
          _
        %v860 = vld [vmem:[#allocation2] sm:$0xff]
        %v861 = vld [vmem:[#allocation2 + $0x8] sm:$0xff]
        %v862 = vld [vmem:[#allocation2 + $0x10] sm:$0xff]
        %v863 = vld [vmem:[#allocation2 + $0x18] sm:$0xff]
        %v864 = vld [vmem:[%s821] sm:$0x1]
        %v865 = vld [vmem:[%s669] sm:$0x1]
        %vm866 = vcmask 261120
        %v867 = vsel %vm866, %v860, 0.0
        %868 = vadd.xlane.f32.xlu0 %v867
        %v869 = vpop.xlane.xlu0 %868
        %v870 = vsel %vm866, %v861, 0.0
        %871 = vadd.xlane.f32.xlu0 %v870
        %v872 = vpop.xlane.xlu0 %871
        %v873 = vsel %vm866, %v862, 0.0
        %874 = vadd.xlane.f32.xlu0 %v873
        %v875 = vpop.xlane.xlu0 %874
        %v876 = vsel %vm866, %v863, 0.0
        %877 = vadd.xlane.f32.xlu0 %v876
        %v878 = vpop.xlane.xlu0 %877
        %v879 = vrcp.pop 32.0
        %v880 = vmul.f32 32.0, %v879
        %v881 = vsub.f32 1.0, %v880
        %v882 = vmul.f32 %v879, %v881
        %v883 = vadd.f32 %v879, %v882
        %vm884 = vweird.f32 %v879
        %v885 = vsel %vm884, %v879, %v883
        %v886 = vmul.f32 %v869, %v885
        %v887 = vmul.f32 %v872, %v885
        %v888 = vmul.f32 %v875, %v885
        %v889 = vmul.f32 %v878, %v885
        %v890 = vsub.f32 %v860, %v886
        %v891 = vsub.f32 %v861, %v887
        %v892 = vsub.f32 %v862, %v888
        %v893 = vsub.f32 %v863, %v889
        %v894 = vmul.f32 %v890, %v890
        %v895 = vmul.f32 %v891, %v891
        %v896 = vmul.f32 %v892, %v892
        %v897 = vmul.f32 %v893, %v893
        %v898 = vsel %vm866, %v894, 0.0
        %899 = vadd.xlane.f32.xlu0 %v898
        %v900 = vpop.xlane.xlu0 %899
        %v901 = vsel %vm866, %v895, 0.0
        %902 = vadd.xlane.f32.xlu0 %v901
        %v903 = vpop.xlane.xlu0 %902
        %v904 = vsel %vm866, %v896, 0.0
        %905 = vadd.xlane.f32.xlu0 %v904
        %v906 = vpop.xlane.xlu0 %905
        %v907 = vsel %vm866, %v897, 0.0
        %908 = vadd.xlane.f32.xlu0 %v907
        %v909 = vpop.xlane.xlu0 %908
        %v910 = vmul.f32 %v900, %v885
        %v911 = vmul.f32 %v903, %v885
        %v912 = vmul.f32 %v906, %v885
        %v913 = vmul.f32 %v909, %v885
        %v914 = vadd.f32 %v910, 1e-05
        %v915 = vadd.f32 %v911, 1e-05
        %v916 = vadd.f32 %v912, 1e-05
        %v917 = vadd.f32 %v913, 1e-05
        %v918 = vrsqrt.pop %v914
        %v919 = vmul.f32 %v918, %v914
        %v920 = vmul.f32 %v919, %v918
        %v921 = vmul.f32 0.5, %v920
        %v922 = vsub.f32 1.5, %v921
        %v923 = vmul.f32 %v918, %v922
        %vm924 = vweird.f32 %v914
        %vm925 = vweird.f32 %v918
        %vm926 = vmor %vm924, %vm925
        %v927 = vsel %vm926, %v918, %v923
        %v928 = vrsqrt.pop %v915
        %v929 = vmul.f32 %v928, %v915
        %v930 = vmul.f32 %v929, %v928
        %v931 = vmul.f32 0.5, %v930
        %v932 = vsub.f32 1.5, %v931
        %v933 = vmul.f32 %v928, %v932
        %vm934 = vweird.f32 %v915
        %vm935 = vweird.f32 %v928
        %vm936 = vmor %vm934, %vm935
        %v937 = vsel %vm936, %v928, %v933
        %v938 = vrsqrt.pop %v916
        %v939 = vmul.f32 %v938, %v916
        %v940 = vmul.f32 %v939, %v938
        %v941 = vmul.f32 0.5, %v940
        %v942 = vsub.f32 1.5, %v941
        %v943 = vmul.f32 %v938, %v942
        %vm944 = vweird.f32 %v916
        %vm945 = vweird.f32 %v938
        %vm946 = vmor %vm944, %vm945
        %v947 = vsel %vm946, %v938, %v943
        %v948 = vrsqrt.pop %v917
        %v949 = vmul.f32 %v948, %v917
        %v950 = vmul.f32 %v949, %v948
        %v951 = vmul.f32 0.5, %v950
        %v952 = vsub.f32 1.5, %v951
        %v953 = vmul.f32 %v948, %v952
        %vm954 = vweird.f32 %v917
        %vm955 = vweird.f32 %v948
        %vm956 = vmor %vm954, %vm955
        %v957 = vsel %vm956, %v948, %v953
        %v958 = vmul.f32 %v890, %v927
        %v959 = vmul.f32 %v891, %v937
        %v960 = vmul.f32 %v892, %v947
        %v961 = vmul.f32 %v893, %v957
        %v963 = vperm.slane %v864, 0
        %v965 = vmul.f32 %v958, %v963
        %v966 = vmul.f32 %v959, %v963
        %v967 = vmul.f32 %v960, %v963
        %v968 = vmul.f32 %v961, %v963
        %v970 = vperm.slane %v865, 0
        %v972 = vadd.f32 %v965, %v970
        %v973 = vadd.f32 %v966, %v970
        %v974 = vadd.f32 %v967, %v970
        %v975 = vadd.f32 %v968, %v970
        %v976 = vpack.c.bf16 %v973, %v972
        %v977 = vpack.c.bf16 %v975, %v974
        %v978 = vld [vmem:[%s826] sm:$0xf]
        %v979 = vld [vmem:[%s826 + $0x4] sm:$0xf]
        %v980 = vld [vmem:[%s826 + $0x8] sm:$0xf]
        %v981 = vld [vmem:[%s826 + $0xc] sm:$0xf]
        %v986 = vunpack.c.l.b16 %v978
        %v987 = vunpack.c.l.b16 %v979
        %v988 = vunpack.c.l.b16 %v980
        %v989 = vunpack.c.l.b16 %v981
        %v990 = vpack.c.b16 %v987, %v986
        %v991 = vpack.c.b16 %v989, %v988
        %v995 = vsel %vm866, %v976, 0
        %v998 = vsel %vm866, %v977, 0
        %1000 = vmatpush.bf16.msra.mxu0 0
        %1001 = vmatpush.bf16.msra.mxu0 0
        %1002 = vmatpush.bf16.msra.mxu0 0
        %1003 = vmatpush.bf16.msra.mxu0 0
        %1004 = vmatpush.bf16.msra.mxu0 0
        %1005 = vmatpush.bf16.msra.mxu0 0
        %1006 = vmatpush.bf16.msra.mxu0 %v991
        %1007 = vmatpush.bf16.msra.mxu0 %v990
        %1008 = vmatmul.bf16.gmra.mxu0 %v995
        %v1009 = vpop.f32.mrf.mxu0
        %v1010 = vadd.f32 0.0, %v1009
        %v1011 = vpop.f32.mrf.mxu0
        %v1012 = vadd.f32 0.0, %v1011
        %1013 = vmatmul.bf16.gmra.mxu0 %v998
        %v1014 = vpop.f32.mrf.mxu0
        %v1015 = vadd.f32 0.0, %v1014
        %v1016 = vpop.f32.mrf.mxu0
        %v1017 = vadd.f32 0.0, %v1016
        %1018 = vdwg.mxu0
        %v1019 = vmul.f32 %v1010, 0.35355338
        %v1020 = vmul.f32 %v1012, 0.35355338
        %v1021 = vmul.f32 %v1015, 0.35355338
        %v1022 = vmul.f32 %v1017, 0.35355338
        %v1023 = vpack.c.bf16 %v1019, %v1019
        %v1024 = vpack.c.bf16 %v1020, %v1020
        %v1025 = vpack.c.bf16 %v1021, %v1021
        %v1026 = vpack.c.bf16 %v1022, %v1022
        %v1027 = vpack.c.bf16 %v1010, %v1010
        %v1028 = vpack.c.bf16 %v1012, %v1012
        %v1029 = vpack.c.bf16 %v1015, %v1015
        %v1030 = vpack.c.bf16 %v1017, %v1017
        %v1033 = vunpack.c.l.b16 %v1023
        %v1034 = vunpack.c.l.b16 %v1024
        %v1035 = vpack.c.b16 %v1034, %v1033
        %v1038 = vunpack.c.l.b16 %v1027
        %v1039 = vunpack.c.l.b16 %v1028
        %v1040 = vpack.c.b16 %v1039, %v1038
        %1041 = vrot.lane.b32.xlu0 %v1040, 96
        %v1042 = vpop.permute.xlu0 %1041
        %vm1043 = vcmask 64512
        %v1045 = vsel %vm1043, %v1035, 0
        %v1048 = vsel %vm1043, %v1042, 0
        %1050 = vmatpush.bf16.xpose.msra.mxu0 0
        %1051 = vmatpush.bf16.xpose.msra.mxu0 0
        %1052 = vmatpush.bf16.xpose.msra.mxu0 0
        %1053 = vmatpush.bf16.xpose.msra.mxu0 0
        %1054 = vmatpush.bf16.xpose.msra.mxu0 0
        %1055 = vmatpush.bf16.xpose.msra.mxu0 0
        %1056 = vmatpush.bf16.xpose.msra.mxu0 0
        %1057 = vmatpush.bf16.xpose.msra.mxu0 %v1048
        %1058 = vmatmul.bf16.gmra.mxu0 %v1045
        %v1059 = vpop.f32.mrf.mxu0
        %v1060 = vadd.f32 0.0, %v1059
        %v1061 = vpop.f32.mrf.mxu0
        %v1062 = vadd.f32 0.0, %v1061
        %1063 = vdwg.mxu0
        %v1066 = vunpack.c.l.b16 %v1025
        %v1067 = vunpack.c.l.b16 %v1026
        %v1068 = vpack.c.b16 %v1067, %v1066
        %v1071 = vunpack.c.l.b16 %v1029
        %v1072 = vunpack.c.l.b16 %v1030
        %v1073 = vpack.c.b16 %v1072, %v1071
        %1074 = vrot.lane.b32.xlu0 %v1073, 96
        %v1075 = vpop.permute.xlu0 %1074
        %v1077 = vsel %vm1043, %v1068, 0
        %v1080 = vsel %vm1043, %v1075, 0
        %1082 = vmatpush.bf16.xpose.msra.mxu0 0
        %1083 = vmatpush.bf16.xpose.msra.mxu0 0
        %1084 = vmatpush.bf16.xpose.msra.mxu0 0
        %1085 = vmatpush.bf16.xpose.msra.mxu0 0
        %1086 = vmatpush.bf16.xpose.msra.mxu0 0
        %1087 = vmatpush.bf16.xpose.msra.mxu0 0
        %1088 = vmatpush.bf16.xpose.msra.mxu0 0
        %1089 = vmatpush.bf16.xpose.msra.mxu0 %v1080
        %1090 = vmatmul.bf16.gmra.mxu0 %v1077
        %v1091 = vpop.f32.mrf.mxu0
        %v1092 = vadd.f32 0.0, %v1091
        %v1093 = vpop.f32.mrf.mxu0
        %v1094 = vadd.f32 0.0, %v1093
        %1095 = vdwg.mxu0
        %vm1096 = vcmask 130048
        %v1097 = vsel %vm1096, %v1060, -inf
        %1098 = vmax.xlane.f32.xlu0 %v1097
        %v1099 = vpop.xlane.xlu0 %1098
        %v1100 = vsel %vm1096, %v1062, -inf
        %1101 = vmax.xlane.f32.xlu0 %v1100
        %v1102 = vpop.xlane.xlu0 %1101
        %v1103 = vsel %vm1096, %v1092, -inf
        %1104 = vmax.xlane.f32.xlu0 %v1103
        %v1105 = vpop.xlane.xlu0 %1104
        %v1106 = vsel %vm1096, %v1094, -inf
        %1107 = vmax.xlane.f32.xlu0 %v1106
        %v1108 = vpop.xlane.xlu0 %1107
        %v1109 = vsub.f32 %v1060, %v1099
        %v1110 = vsub.f32 %v1062, %v1102
        %v1111 = vsub.f32 %v1092, %v1105
        %v1112 = vsub.f32 %v1094, %v1108
        %v1113 = vmul.f32 %v1109, 1.442695
        %v1114 = vpow.pop %v1113
        %v1115 = vmul.f32 %v1110, 1.442695
        %v1116 = vpow.pop %v1115
        %v1117 = vmul.f32 %v1111, 1.442695
        %v1118 = vpow.pop %v1117
        %v1119 = vmul.f32 %v1112, 1.442695
        %v1120 = vpow.pop %v1119
        %v1121 = vsel %vm1096, %v1114, 0.0
        %1122 = vadd.xlane.f32.xlu0 %v1121
        %v1123 = vpop.xlane.xlu0 %1122
        %v1124 = vsel %vm1096, %v1116, 0.0
        %1125 = vadd.xlane.f32.xlu0 %v1124
        %v1126 = vpop.xlane.xlu0 %1125
        %v1127 = vsel %vm1096, %v1118, 0.0
        %1128 = vadd.xlane.f32.xlu0 %v1127
        %v1129 = vpop.xlane.xlu0 %1128
        %v1130 = vsel %vm1096, %v1120, 0.0
        %1131 = vadd.xlane.f32.xlu0 %v1130
        %v1132 = vpop.xlane.xlu0 %1131
        %v1133 = vrcp.pop %v1123
        %v1134 = vrcp.pop %v1126
        %v1135 = vrcp.pop %v1129
        %v1136 = vrcp.pop %v1132
        %v1137 = vmul.f32 %v1114, %v1133
        %v1138 = vmul.f32 %v1116, %v1134
        %v1139 = vmul.f32 %v1118, %v1135
        %v1140 = vmul.f32 %v1120, %v1136
        %v1141 = vpack.c.bf16 %v1137, %v1137
        %v1142 = vpack.c.bf16 %v1138, %v1138
        %v1143 = vpack.c.bf16 %v1139, %v1139
        %v1144 = vpack.c.bf16 %v1140, %v1140
        %v1147 = vunpack.c.l.b16 %v1141
        %v1148 = vunpack.c.l.b16 %v1142
        %v1149 = vpack.c.b16 %v1148, %v1147
        %1150 = vrot.lane.b32.xlu0 %v1040, 64
        %v1151 = vpop.permute.xlu0 %1150
        %v1154 = vsel %vm1096, %v1149, 0
        %1156 = vmatpush.bf16.msra.mxu0 0
        %1157 = vmatpush.bf16.msra.mxu0 0
        %1158 = vmatpush.bf16.msra.mxu0 0
        %1159 = vmatpush.bf16.msra.mxu0 0
        %1160 = vmatpush.bf16.msra.mxu0 0
        %1161 = vmatpush.bf16.msra.mxu0 0
        %1162 = vmatpush.bf16.msra.mxu0 0
        %1163 = vmatpush.bf16.msra.mxu0 %v1151
        %1164 = vmatmul.bf16.gmra.mxu0 %v1154
        %v1165 = vpop.f32.mrf.mxu0
        %v1166 = vadd.f32 0.0, %v1165
        %v1167 = vpop.f32.mrf.mxu0
        %v1168 = vadd.f32 0.0, %v1167
        %1169 = vdwg.mxu0
        %v1172 = vunpack.c.l.b16 %v1143
        %v1173 = vunpack.c.l.b16 %v1144
        %v1174 = vpack.c.b16 %v1173, %v1172
        %1175 = vrot.lane.b32.xlu0 %v1073, 64
        %v1176 = vpop.permute.xlu0 %1175
        %v1179 = vsel %vm1096, %v1174, 0
        %1181 = vmatpush.bf16.msra.mxu0 0
        %1182 = vmatpush.bf16.msra.mxu0 0
        %1183 = vmatpush.bf16.msra.mxu0 0
        %1184 = vmatpush.bf16.msra.mxu0 0
        %1185 = vmatpush.bf16.msra.mxu0 0
        %1186 = vmatpush.bf16.msra.mxu0 0
        %1187 = vmatpush.bf16.msra.mxu0 0
        %1188 = vmatpush.bf16.msra.mxu0 %v1176
        %1189 = vmatmul.bf16.gmra.mxu0 %v1179
        %v1190 = vpop.f32.mrf.mxu0
        %v1191 = vadd.f32 0.0, %v1190
        %v1192 = vpop.f32.mrf.mxu0
        %v1193 = vadd.f32 0.0, %v1192
        %1194 = vdwg.mxu0
        %v1195 = vpack.c.bf16 %v1166, %v1166
        %v1196 = vpack.c.bf16 %v1168, %v1168
        %v1197 = vpack.c.bf16 %v1191, %v1191
        %v1198 = vpack.c.bf16 %v1193, %v1193
        %vm1199 = vcmask 60416
        %1200 = vst.msk [vmem:[#allocation3] sm:$0xf] %vm1199, %v1195
        %1201 = vst.msk [vmem:[#allocation3 + $0x4] sm:$0xf] %vm1199, %v1196
        %1202 = vst.msk [vmem:[#allocation3 + $0x8] sm:$0xf] %vm1199, %v1197
        %1203 = vst.msk [vmem:[#allocation3 + $0xc] sm:$0xf] %vm1199, %v1198
        %1204 = vrot.lane.b32.xlu0 %v1035, 120
        %v1205 = vpop.permute.xlu0 %1204
        %1206 = vrot.lane.b32.xlu0 %v1040, 88
        %v1207 = vpop.permute.xlu0 %1206
        %v1209 = vsel %vm1043, %v1205, 0
        %v1212 = vsel %vm1043, %v1207, 0
        %1214 = vmatpush.bf16.xpose.msra.mxu0 0
        %1215 = vmatpush.bf16.xpose.msra.mxu0 0
        %1216 = vmatpush.bf16.xpose.msra.mxu0 0
        %1217 = vmatpush.bf16.xpose.msra.mxu0 0
        %1218 = vmatpush.bf16.xpose.msra.mxu0 0
        %1219 = vmatpush.bf16.xpose.msra.mxu0 0
        %1220 = vmatpush.bf16.xpose.msra.mxu0 0
        %1221 = vmatpush.bf16.xpose.msra.mxu0 %v1212
        %1222 = vmatmul.bf16.gmra.mxu0 %v1209
        %v1223 = vpop.f32.mrf.mxu0
        %v1224 = vadd.f32 0.0, %v1223
        %v1225 = vpop.f32.mrf.mxu0
        %v1226 = vadd.f32 0.0, %v1225
        %1227 = vdwg.mxu0
        %1228 = vrot.lane.b32.xlu0 %v1068, 120
        %v1229 = vpop.permute.xlu0 %1228
        %1230 = vrot.lane.b32.xlu0 %v1073, 88
        %v1231 = vpop.permute.xlu0 %1230
        %v1233 = vsel %vm1043, %v1229, 0
        %v1236 = vsel %vm1043, %v1231, 0
        %1238 = vmatpush.bf16.xpose.msra.mxu0 0
        %1239 = vmatpush.bf16.xpose.msra.mxu0 0
        %1240 = vmatpush.bf16.xpose.msra.mxu0 0
        %1241 = vmatpush.bf16.xpose.msra.mxu0 0
        %1242 = vmatpush.bf16.xpose.msra.mxu0 0
        %1243 = vmatpush.bf16.xpose.msra.mxu0 0
        %1244 = vmatpush.bf16.xpose.msra.mxu0 0
        %1245 = vmatpush.bf16.xpose.msra.mxu0 %v1236
        %1246 = vmatmul.bf16.gmra.mxu0 %v1233
        %v1247 = vpop.f32.mrf.mxu0
        %v1248 = vadd.f32 0.0, %v1247
        %v1249 = vpop.f32.mrf.mxu0
        %v1250 = vadd.f32 0.0, %v1249
        %1251 = vdwg.mxu0
        %v1252 = vsel %vm1096, %v1224, -inf
        %1253 = vmax.xlane.f32.xlu0 %v1252
        %v1254 = vpop.xlane.xlu0 %1253
        %v1255 = vsel %vm1096, %v1226, -inf
        %1256 = vmax.xlane.f32.xlu0 %v1255
        %v1257 = vpop.xlane.xlu0 %1256
        %v1258 = vsel %vm1096, %v1248, -inf
        %1259 = vmax.xlane.f32.xlu0 %v1258
        %v1260 = vpop.xlane.xlu0 %1259
        %v1261 = vsel %vm1096, %v1250, -inf
        %1262 = vmax.xlane.f32.xlu0 %v1261
        %v1263 = vpop.xlane.xlu0 %1262
        %v1264 = vsub.f32 %v1224, %v1254
        %v1265 = vsub.f32 %v1226, %v1257
        %v1266 = vsub.f32 %v1248, %v1260
        %v1267 = vsub.f32 %v1250, %v1263
        %v1268 = vmul.f32 %v1264, 1.442695
        %v1269 = vpow.pop %v1268
        %v1270 = vmul.f32 %v1265, 1.442695
        %v1271 = vpow.pop %v1270
        %v1272 = vmul.f32 %v1266, 1.442695
        %v1273 = vpow.pop %v1272
        %v1274 = vmul.f32 %v1267, 1.442695
        %v1275 = vpow.pop %v1274
        %v1276 = vsel %vm1096, %v1269, 0.0
        %1277 = vadd.xlane.f32.xlu0 %v1276
        %v1278 = vpop.xlane.xlu0 %1277
        %v1279 = vsel %vm1096, %v1271, 0.0
        %1280 = vadd.xlane.f32.xlu0 %v1279
        %v1281 = vpop.xlane.xlu0 %1280
        %v1282 = vsel %vm1096, %v1273, 0.0
        %1283 = vadd.xlane.f32.xlu0 %v1282
        %v1284 = vpop.xlane.xlu0 %1283
        %v1285 = vsel %vm1096, %v1275, 0.0
        %1286 = vadd.xlane.f32.xlu0 %v1285
        %v1287 = vpop.xlane.xlu0 %1286
        %v1288 = vrcp.pop %v1278
        %v1289 = vrcp.pop %v1281
        %v1290 = vrcp.pop %v1284
        %v1291 = vrcp.pop %v1287
        %v1292 = vmul.f32 %v1269, %v1288
        %v1293 = vmul.f32 %v1271, %v1289
        %v1294 = vmul.f32 %v1273, %v1290
        %v1295 = vmul.f32 %v1275, %v1291
        %v1296 = vpack.c.bf16 %v1292, %v1292
        %v1297 = vpack.c.bf16 %v1293, %v1293
        %v1298 = vpack.c.bf16 %v1294, %v1294
        %v1299 = vpack.c.bf16 %v1295, %v1295
        %v1302 = vunpack.c.l.b16 %v1296
        %v1303 = vunpack.c.l.b16 %v1297
        %v1304 = vpack.c.b16 %v1303, %v1302
        %1305 = vrot.lane.b32.xlu0 %v1040, 56
        %v1306 = vpop.permute.xlu0 %1305
        %v1309 = vsel %vm1096, %v1304, 0
        %1311 = vmatpush.bf16.msra.mxu0 0
        %1312 = vmatpush.bf16.msra.mxu0 0
        %1313 = vmatpush.bf16.msra.mxu0 0
        %1314 = vmatpush.bf16.msra.mxu0 0
        %1315 = vmatpush.bf16.msra.mxu0 0
        %1316 = vmatpush.bf16.msra.mxu0 0
        %1317 = vmatpush.bf16.msra.mxu0 0
        %1318 = vmatpush.bf16.msra.mxu0 %v1306
        %1319 = vmatmul.bf16.gmra.mxu0 %v1309
        %v1320 = vpop.f32.mrf.mxu0
        %v1321 = vadd.f32 0.0, %v1320
        %v1322 = vpop.f32.mrf.mxu0
        %v1323 = vadd.f32 0.0, %v1322
        %1324 = vdwg.mxu0
        %v1327 = vunpack.c.l.b16 %v1298
        %v1328 = vunpack.c.l.b16 %v1299
        %v1329 = vpack.c.b16 %v1328, %v1327
        %1330 = vrot.lane.b32.xlu0 %v1073, 56
        %v1331 = vpop.permute.xlu0 %1330
        %v1334 = vsel %vm1096, %v1329, 0
        %1336 = vmatpush.bf16.msra.mxu0 0
        %1337 = vmatpush.bf16.msra.mxu0 0
        %1338 = vmatpush.bf16.msra.mxu0 0
        %1339 = vmatpush.bf16.msra.mxu0 0
        %1340 = vmatpush.bf16.msra.mxu0 0
        %1341 = vmatpush.bf16.msra.mxu0 0
        %1342 = vmatpush.bf16.msra.mxu0 0
        %1343 = vmatpush.bf16.msra.mxu0 %v1331
        %1344 = vmatmul.bf16.gmra.mxu0 %v1334
        %v1345 = vpop.f32.mrf.mxu0
        %v1346 = vadd.f32 0.0, %v1345
        %v1347 = vpop.f32.mrf.mxu0
        %v1348 = vadd.f32 0.0, %v1347
        %1349 = vdwg.mxu0
        %v1350 = vpack.c.bf16 %v1321, %v1321
        %v1351 = vpack.c.bf16 %v1323, %v1323
        %v1352 = vpack.c.bf16 %v1346, %v1346
        %v1353 = vpack.c.bf16 %v1348, %v1348
        %1358 = vrot.lane.b32.xlu0 %v1350, 8
        %v1359 = vpop.permute.xlu0 %1358
        %1360 = vrot.lane.b32.xlu0 %v1351, 8
        %v1361 = vpop.permute.xlu0 %1360
        %1362 = vrot.lane.b32.xlu0 %v1352, 8
        %v1363 = vpop.permute.xlu0 %1362
        %1364 = vrot.lane.b32.xlu0 %v1353, 8
        %v1365 = vpop.permute.xlu0 %1364
        %vm1370 = vcmask 126016
        %1371 = vst.msk [vmem:[#allocation3] sm:$0xf] %vm1370, %v1359
        %1372 = vst.msk [vmem:[#allocation3 + $0x4] sm:$0xf] %vm1370, %v1361
        %1373 = vst.msk [vmem:[#allocation3 + $0x8] sm:$0xf] %vm1370, %v1363
        %1374 = vst.msk [vmem:[#allocation3 + $0xc] sm:$0xf] %vm1370, %v1365
        %1375 = vrot.lane.b32.xlu0 %v1035, 112
        %v1376 = vpop.permute.xlu0 %1375
        %1377 = vrot.lane.b32.xlu0 %v1040, 80
        %v1378 = vpop.permute.xlu0 %1377
        %v1380 = vsel %vm1043, %v1376, 0
        %v1383 = vsel %vm1043, %v1378, 0
        %1385 = vmatpush.bf16.xpose.msra.mxu0 0
        %1386 = vmatpush.bf16.xpose.msra.mxu0 0
        %1387 = vmatpush.bf16.xpose.msra.mxu0 0
        %1388 = vmatpush.bf16.xpose.msra.mxu0 0
        %1389 = vmatpush.bf16.xpose.msra.mxu0 0
        %1390 = vmatpush.bf16.xpose.msra.mxu0 0
        %1391 = vmatpush.bf16.xpose.msra.mxu0 0
        %1392 = vmatpush.bf16.xpose.msra.mxu0 %v1383
        %1393 = vmatmul.bf16.gmra.mxu0 %v1380
        %v1394 = vpop.f32.mrf.mxu0
        %v1395 = vadd.f32 0.0, %v1394
        %v1396 = vpop.f32.mrf.mxu0
        %v1397 = vadd.f32 0.0, %v1396
        %1398 = vdwg.mxu0
        %1399 = vrot.lane.b32.xlu0 %v1068, 112
        %v1400 = vpop.permute.xlu0 %1399
        %1401 = vrot.lane.b32.xlu0 %v1073, 80
        %v1402 = vpop.permute.xlu0 %1401
        %v1404 = vsel %vm1043, %v1400, 0
        %v1407 = vsel %vm1043, %v1402, 0
        %1409 = vmatpush.bf16.xpose.msra.mxu0 0
        %1410 = vmatpush.bf16.xpose.msra.mxu0 0
        %1411 = vmatpush.bf16.xpose.msra.mxu0 0
        %1412 = vmatpush.bf16.xpose.msra.mxu0 0
        %1413 = vmatpush.bf16.xpose.msra.mxu0 0
        %1414 = vmatpush.bf16.xpose.msra.mxu0 0
        %1415 = vmatpush.bf16.xpose.msra.mxu0 0
        %1416 = vmatpush.bf16.xpose.msra.mxu0 %v1407
        %1417 = vmatmul.bf16.gmra.mxu0 %v1404
        %v1418 = vpop.f32.mrf.mxu0
        %v1419 = vadd.f32 0.0, %v1418
        %v1420 = vpop.f32.mrf.mxu0
        %v1421 = vadd.f32 0.0, %v1420
        %1422 = vdwg.mxu0
        %v1423 = vsel %vm1096, %v1395, -inf
        %1424 = vmax.xlane.f32.xlu0 %v1423
        %v1425 = vpop.xlane.xlu0 %1424
        %v1426 = vsel %vm1096, %v1397, -inf
        %1427 = vmax.xlane.f32.xlu0 %v1426
        %v1428 = vpop.xlane.xlu0 %1427
        %v1429 = vsel %vm1096, %v1419, -inf
        %1430 = vmax.xlane.f32.xlu0 %v1429
        %v1431 = vpop.xlane.xlu0 %1430
        %v1432 = vsel %vm1096, %v1421, -inf
        %1433 = vmax.xlane.f32.xlu0 %v1432
        %v1434 = vpop.xlane.xlu0 %1433
        %v1435 = vsub.f32 %v1395, %v1425
        %v1436 = vsub.f32 %v1397, %v1428
        %v1437 = vsub.f32 %v1419, %v1431
        %v1438 = vsub.f32 %v1421, %v1434
        %v1439 = vmul.f32 %v1435, 1.442695
        %v1440 = vpow.pop %v1439
        %v1441 = vmul.f32 %v1436, 1.442695
        %v1442 = vpow.pop %v1441
        %v1443 = vmul.f32 %v1437, 1.442695
        %v1444 = vpow.pop %v1443
        %v1445 = vmul.f32 %v1438, 1.442695
        %v1446 = vpow.pop %v1445
        %v1447 = vsel %vm1096, %v1440, 0.0
        %1448 = vadd.xlane.f32.xlu0 %v1447
        %v1449 = vpop.xlane.xlu0 %1448
        %v1450 = vsel %vm1096, %v1442, 0.0
        %1451 = vadd.xlane.f32.xlu0 %v1450
        %v1452 = vpop.xlane.xlu0 %1451
        %v1453 = vsel %vm1096, %v1444, 0.0
        %1454 = vadd.xlane.f32.xlu0 %v1453
        %v1455 = vpop.xlane.xlu0 %1454
        %v1456 = vsel %vm1096, %v1446, 0.0
        %1457 = vadd.xlane.f32.xlu0 %v1456
        %v1458 = vpop.xlane.xlu0 %1457
        %v1459 = vrcp.pop %v1449
        %v1460 = vrcp.pop %v1452
        %v1461 = vrcp.pop %v1455
        %v1462 = vrcp.pop %v1458
        %v1463 = vmul.f32 %v1440, %v1459
        %v1464 = vmul.f32 %v1442, %v1460
        %v1465 = vmul.f32 %v1444, %v1461
        %v1466 = vmul.f32 %v1446, %v1462
        %v1467 = vpack.c.bf16 %v1463, %v1463
        %v1468 = vpack.c.bf16 %v1464, %v1464
        %v1469 = vpack.c.bf16 %v1465, %v1465
        %v1470 = vpack.c.bf16 %v1466, %v1466
        %v1473 = vunpack.c.l.b16 %v1467
        %v1474 = vunpack.c.l.b16 %v1468
        %v1475 = vpack.c.b16 %v1474, %v1473
        %1476 = vrot.lane.b32.xlu0 %v1040, 48
        %v1477 = vpop.permute.xlu0 %1476
        %v1480 = vsel %vm1096, %v1475, 0
        %1482 = vmatpush.bf16.msra.mxu0 0
        %1483 = vmatpush.bf16.msra.mxu0 0
        %1484 = vmatpush.bf16.msra.mxu0 0
        %1485 = vmatpush.bf16.msra.mxu0 0
        %1486 = vmatpush.bf16.msra.mxu0 0
        %1487 = vmatpush.bf16.msra.mxu0 0
        %1488 = vmatpush.bf16.msra.mxu0 0
        %1489 = vmatpush.bf16.msra.mxu0 %v1477
        %1490 = vmatmul.bf16.gmra.mxu0 %v1480
        %v1491 = vpop.f32.mrf.mxu0
        %v1492 = vadd.f32 0.0, %v1491
        %v1493 = vpop.f32.mrf.mxu0
        %v1494 = vadd.f32 0.0, %v1493
        %1495 = vdwg.mxu0
        %v1498 = vunpack.c.l.b16 %v1469
        %v1499 = vunpack.c.l.b16 %v1470
        %v1500 = vpack.c.b16 %v1499, %v1498
        %1501 = vrot.lane.b32.xlu0 %v1073, 48
        %v1502 = vpop.permute.xlu0 %1501
        %v1505 = vsel %vm1096, %v1500, 0
        %1507 = vmatpush.bf16.msra.mxu0 0
        %1508 = vmatpush.bf16.msra.mxu0 0
        %1509 = vmatpush.bf16.msra.mxu0 0
        %1510 = vmatpush.bf16.msra.mxu0 0
        %1511 = vmatpush.bf16.msra.mxu0 0
        %1512 = vmatpush.bf16.msra.mxu0 0
        %1513 = vmatpush.bf16.msra.mxu0 0
        %1514 = vmatpush.bf16.msra.mxu0 %v1502
        %1515 = vmatmul.bf16.gmra.mxu0 %v1505
        %v1516 = vpop.f32.mrf.mxu0
        %v1517 = vadd.f32 0.0, %v1516
        %v1518 = vpop.f32.mrf.mxu0
        %v1519 = vadd.f32 0.0, %v1518
        %1520 = vdwg.mxu0
        %v1521 = vpack.c.bf16 %v1492, %v1492
        %v1522 = vpack.c.bf16 %v1494, %v1494
        %v1523 = vpack.c.bf16 %v1517, %v1517
        %v1524 = vpack.c.bf16 %v1519, %v1519
        %1529 = vrot.lane.b32.xlu0 %v1521, 16
        %v1530 = vpop.permute.xlu0 %1529
        %1531 = vrot.lane.b32.xlu0 %v1522, 16
        %v1532 = vpop.permute.xlu0 %1531
        %1533 = vrot.lane.b32.xlu0 %v1523, 16
        %v1534 = vpop.permute.xlu0 %1533
        %1535 = vrot.lane.b32.xlu0 %v1524, 16
        %v1536 = vpop.permute.xlu0 %1535
        %vm1541 = vcmask 191616
        %1542 = vst.msk [vmem:[#allocation3] sm:$0xf] %vm1541, %v1530
        %1543 = vst.msk [vmem:[#allocation3 + $0x4] sm:$0xf] %vm1541, %v1532
        %1544 = vst.msk [vmem:[#allocation3 + $0x8] sm:$0xf] %vm1541, %v1534
        %1545 = vst.msk [vmem:[#allocation3 + $0xc] sm:$0xf] %vm1541, %v1536
        %1546 = vrot.lane.b32.xlu0 %v1035, 104
        %v1547 = vpop.permute.xlu0 %1546
        %1548 = vrot.lane.b32.xlu0 %v1040, 72
        %v1549 = vpop.permute.xlu0 %1548
        %v1551 = vsel %vm1043, %v1547, 0
        %v1554 = vsel %vm1043, %v1549, 0
        %1556 = vmatpush.bf16.xpose.msra.mxu0 0
        %1557 = vmatpush.bf16.xpose.msra.mxu0 0
        %1558 = vmatpush.bf16.xpose.msra.mxu0 0
        %1559 = vmatpush.bf16.xpose.msra.mxu0 0
        %1560 = vmatpush.bf16.xpose.msra.mxu0 0
        %1561 = vmatpush.bf16.xpose.msra.mxu0 0
        %1562 = vmatpush.bf16.xpose.msra.mxu0 0
        %1563 = vmatpush.bf16.xpose.msra.mxu0 %v1554
        %1564 = vmatmul.bf16.gmra.mxu0 %v1551
        %v1565 = vpop.f32.mrf.mxu0
        %v1566 = vadd.f32 0.0, %v1565
        %v1567 = vpop.f32.mrf.mxu0
        %v1568 = vadd.f32 0.0, %v1567
        %1569 = vdwg.mxu0
        %1570 = vrot.lane.b32.xlu0 %v1068, 104
        %v1571 = vpop.permute.xlu0 %1570
        %1572 = vrot.lane.b32.xlu0 %v1073, 72
        %v1573 = vpop.permute.xlu0 %1572
        %v1575 = vsel %vm1043, %v1571, 0
        %v1578 = vsel %vm1043, %v1573, 0
        %1580 = vmatpush.bf16.xpose.msra.mxu0 0
        %1581 = vmatpush.bf16.xpose.msra.mxu0 0
        %1582 = vmatpush.bf16.xpose.msra.mxu0 0
        %1583 = vmatpush.bf16.xpose.msra.mxu0 0
        %1584 = vmatpush.bf16.xpose.msra.mxu0 0
        %1585 = vmatpush.bf16.xpose.msra.mxu0 0
        %1586 = vmatpush.bf16.xpose.msra.mxu0 0
        %1587 = vmatpush.bf16.xpose.msra.mxu0 %v1578
        %1588 = vmatmul.bf16.gmra.mxu0 %v1575
        %v1589 = vpop.f32.mrf.mxu0
        %v1590 = vadd.f32 0.0, %v1589
        %v1591 = vpop.f32.mrf.mxu0
        %v1592 = vadd.f32 0.0, %v1591
        %1593 = vdwg.mxu0
        %v1594 = vsel %vm1096, %v1566, -inf
        %1595 = vmax.xlane.f32.xlu0 %v1594
        %v1596 = vpop.xlane.xlu0 %1595
        %v1597 = vsel %vm1096, %v1568, -inf
        %1598 = vmax.xlane.f32.xlu0 %v1597
        %v1599 = vpop.xlane.xlu0 %1598
        %v1600 = vsel %vm1096, %v1590, -inf
        %1601 = vmax.xlane.f32.xlu0 %v1600
        %v1602 = vpop.xlane.xlu0 %1601
        %v1603 = vsel %vm1096, %v1592, -inf
        %1604 = vmax.xlane.f32.xlu0 %v1603
        %v1605 = vpop.xlane.xlu0 %1604
        %v1606 = vsub.f32 %v1566, %v1596
        %v1607 = vsub.f32 %v1568, %v1599
        %v1608 = vsub.f32 %v1590, %v1602
        %v1609 = vsub.f32 %v1592, %v1605
        %v1610 = vmul.f32 %v1606, 1.442695
        %v1611 = vpow.pop %v1610
        %v1612 = vmul.f32 %v1607, 1.442695
        %v1613 = vpow.pop %v1612
        %v1614 = vmul.f32 %v1608, 1.442695
        %v1615 = vpow.pop %v1614
        %v1616 = vmul.f32 %v1609, 1.442695
        %v1617 = vpow.pop %v1616
        %v1618 = vsel %vm1096, %v1611, 0.0
        %1619 = vadd.xlane.f32.xlu0 %v1618
        %v1620 = vpop.xlane.xlu0 %1619
        %v1621 = vsel %vm1096, %v1613, 0.0
        %1622 = vadd.xlane.f32.xlu0 %v1621
        %v1623 = vpop.xlane.xlu0 %1622
        %v1624 = vsel %vm1096, %v1615, 0.0
        %1625 = vadd.xlane.f32.xlu0 %v1624
        %v1626 = vpop.xlane.xlu0 %1625
        %v1627 = vsel %vm1096, %v1617, 0.0
        %1628 = vadd.xlane.f32.xlu0 %v1627
        %v1629 = vpop.xlane.xlu0 %1628
        %v1630 = vrcp.pop %v1620
        %v1631 = vrcp.pop %v1623
        %v1632 = vrcp.pop %v1626
        %v1633 = vrcp.pop %v1629
        %v1634 = vmul.f32 %v1611, %v1630
        %v1635 = vmul.f32 %v1613, %v1631
        %v1636 = vmul.f32 %v1615, %v1632
        %v1637 = vmul.f32 %v1617, %v1633
        %v1638 = vpack.c.bf16 %v1634, %v1634
        %v1639 = vpack.c.bf16 %v1635, %v1635
        %v1640 = vpack.c.bf16 %v1636, %v1636
        %v1641 = vpack.c.bf16 %v1637, %v1637
        %v1644 = vunpack.c.l.b16 %v1638
        %v1645 = vunpack.c.l.b16 %v1639
        %v1646 = vpack.c.b16 %v1645, %v1644
        %1647 = vrot.lane.b32.xlu0 %v1040, 40
        %v1648 = vpop.permute.xlu0 %1647
        %v1651 = vsel %vm1096, %v1646, 0
        %1653 = vmatpush.bf16.msra.mxu0 0
        %1654 = vmatpush.bf16.msra.mxu0 0
        %1655 = vmatpush.bf16.msra.mxu0 0
        %1656 = vmatpush.bf16.msra.mxu0 0
        %1657 = vmatpush.bf16.msra.mxu0 0
        %1658 = vmatpush.bf16.msra.mxu0 0
        %1659 = vmatpush.bf16.msra.mxu0 0
        %1660 = vmatpush.bf16.msra.mxu0 %v1648
        %1661 = vmatmul.bf16.gmra.mxu0 %v1651
        %v1662 = vpop.f32.mrf.mxu0
        %v1663 = vadd.f32 0.0, %v1662
        %v1664 = vpop.f32.mrf.mxu0
        %v1665 = vadd.f32 0.0, %v1664
        %1666 = vdwg.mxu0
        %v1669 = vunpack.c.l.b16 %v1640
        %v1670 = vunpack.c.l.b16 %v1641
        %v1671 = vpack.c.b16 %v1670, %v1669
        %1672 = vrot.lane.b32.xlu0 %v1073, 40
        %v1673 = vpop.permute.xlu0 %1672
        %v1676 = vsel %vm1096, %v1671, 0
        %1678 = vmatpush.bf16.msra.mxu0 0
        %1679 = vmatpush.bf16.msra.mxu0 0
        %1680 = vmatpush.bf16.msra.mxu0 0
        %1681 = vmatpush.bf16.msra.mxu0 0
        %1682 = vmatpush.bf16.msra.mxu0 0
        %1683 = vmatpush.bf16.msra.mxu0 0
        %1684 = vmatpush.bf16.msra.mxu0 0
        %1685 = vmatpush.bf16.msra.mxu0 %v1673
        %1686 = vmatmul.bf16.gmra.mxu0 %v1676
        %v1687 = vpop.f32.mrf.mxu0
        %v1688 = vadd.f32 0.0, %v1687
        %v1689 = vpop.f32.mrf.mxu0
        %v1690 = vadd.f32 0.0, %v1689
        %1691 = vdwg.mxu0
        %v1692 = vpack.c.bf16 %v1663, %v1663
        %v1693 = vpack.c.bf16 %v1665, %v1665
        %v1694 = vpack.c.bf16 %v1688, %v1688
        %v1695 = vpack.c.bf16 %v1690, %v1690
        %1700 = vrot.lane.b32.xlu0 %v1692, 24
        %v1701 = vpop.permute.xlu0 %1700
        %1702 = vrot.lane.b32.xlu0 %v1693, 24
        %v1703 = vpop.permute.xlu0 %1702
        %1704 = vrot.lane.b32.xlu0 %v1694, 24
        %v1705 = vpop.permute.xlu0 %1704
        %1706 = vrot.lane.b32.xlu0 %v1695, 24
        %v1707 = vpop.permute.xlu0 %1706
        %vm1712 = vcmask 257216
        %1713 = vst.msk [vmem:[#allocation3] sm:$0xf] %vm1712, %v1701
        %1714 = vst.msk [vmem:[#allocation3 + $0x4] sm:$0xf] %vm1712, %v1703
        %1715 = vst.msk [vmem:[#allocation3 + $0x8] sm:$0xf] %vm1712, %v1705
        %1716 = vst.msk [vmem:[#allocation3 + $0xc] sm:$0xf] %vm1712, %v1707
        %v1717 = vld [vmem:[#allocation3] sm:$0xf]
        %v1718 = vld [vmem:[#allocation3 + $0x4] sm:$0xf]
        %v1719 = vld [vmem:[#allocation3 + $0x8] sm:$0xf]
        %v1720 = vld [vmem:[#allocation3 + $0xc] sm:$0xf]
        %v1721 = vld [vmem:[%s831] sm:$0xf]
        %v1722 = vld [vmem:[%s831 + $0x4] sm:$0xf]
        %v1723 = vld [vmem:[%s831 + $0x8] sm:$0xf]
        %v1724 = vld [vmem:[%s831 + $0xc] sm:$0xf]
        %v1729 = vunpack.c.l.b16 %v1717
        %v1730 = vunpack.c.l.b16 %v1718
        %v1731 = vunpack.c.l.b16 %v1719
        %v1732 = vunpack.c.l.b16 %v1720
        %v1733 = vpack.c.b16 %v1730, %v1729
        %v1734 = vpack.c.b16 %v1732, %v1731
        %v1739 = vunpack.c.l.b16 %v1721
        %v1740 = vunpack.c.l.b16 %v1722
        %v1741 = vunpack.c.l.b16 %v1723
        %v1742 = vunpack.c.l.b16 %v1724
        %v1743 = vpack.c.b16 %v1740, %v1739
        %v1744 = vpack.c.b16 %v1742, %v1741
        %v1748 = vsel %vm866, %v1733, 0
        %v1751 = vsel %vm866, %v1734, 0
        %1753 = vmatpush.bf16.msra.mxu0 0
        %1754 = vmatpush.bf16.msra.mxu0 0
        %1755 = vmatpush.bf16.msra.mxu0 0
        %1756 = vmatpush.bf16.msra.mxu0 0
        %1757 = vmatpush.bf16.msra.mxu0 0
        %1758 = vmatpush.bf16.msra.mxu0 0
        %1759 = vmatpush.bf16.msra.mxu0 %v1744
        %1760 = vmatpush.bf16.msra.mxu0 %v1743
        %1761 = vmatmul.bf16.gmra.mxu0 %v1748
        %v1762 = vpop.f32.mrf.mxu0
        %v1763 = vadd.f32 0.0, %v1762
        %v1764 = vpop.f32.mrf.mxu0
        %v1765 = vadd.f32 0.0, %v1764
        %1766 = vmatmul.bf16.gmra.mxu0 %v1751
        %v1767 = vpop.f32.mrf.mxu0
        %v1768 = vadd.f32 0.0, %v1767
        %v1769 = vpop.f32.mrf.mxu0
        %v1770 = vadd.f32 0.0, %v1769
        %1771 = vdwg.mxu0
        %v1772 = vadd.f32 %v860, %v1763
        %v1773 = vadd.f32 %v861, %v1765
        %v1774 = vadd.f32 %v862, %v1768
        %v1775 = vadd.f32 %v863, %v1770
        %v1776 = vld [vmem:[%s678] sm:$0x1]
        %v1778 = vperm.slane %v1776, 0
        %v1780 = vadd.f32 %v1772, %v1778
        %v1781 = vadd.f32 %v1773, %v1778
        %v1782 = vadd.f32 %v1774, %v1778
        %v1783 = vadd.f32 %v1775, %v1778
        %v1784 = vld [vmem:[%s834] sm:$0x1]
        %v1785 = vld [vmem:[%s687] sm:$0x1]
        %v1786 = vsel %vm866, %v1780, 0.0
        %1787 = vadd.xlane.f32.xlu0 %v1786
        %v1788 = vpop.xlane.xlu0 %1787
        %v1789 = vsel %vm866, %v1781, 0.0
        %1790 = vadd.xlane.f32.xlu0 %v1789
        %v1791 = vpop.xlane.xlu0 %1790
        %v1792 = vsel %vm866, %v1782, 0.0
        %1793 = vadd.xlane.f32.xlu0 %v1792
        %v1794 = vpop.xlane.xlu0 %1793
        %v1795 = vsel %vm866, %v1783, 0.0
        %1796 = vadd.xlane.f32.xlu0 %v1795
        %v1797 = vpop.xlane.xlu0 %1796
        %v1798 = vmul.f32 %v1788, %v885
        %v1799 = vmul.f32 %v1791, %v885
        %v1800 = vmul.f32 %v1794, %v885
        %v1801 = vmul.f32 %v1797, %v885
        %v1802 = vsub.f32 %v1780, %v1798
        %v1803 = vsub.f32 %v1781, %v1799
        %v1804 = vsub.f32 %v1782, %v1800
        %v1805 = vsub.f32 %v1783, %v1801
        %v1806 = vmul.f32 %v1802, %v1802
        %v1807 = vmul.f32 %v1803, %v1803
        %v1808 = vmul.f32 %v1804, %v1804
        %v1809 = vmul.f32 %v1805, %v1805
        %v1810 = vsel %vm866, %v1806, 0.0
        %1811 = vadd.xlane.f32.xlu0 %v1810
        %v1812 = vpop.xlane.xlu0 %1811
        %v1813 = vsel %vm866, %v1807, 0.0
        %1814 = vadd.xlane.f32.xlu0 %v1813
        %v1815 = vpop.xlane.xlu0 %1814
        %v1816 = vsel %vm866, %v1808, 0.0
        %1817 = vadd.xlane.f32.xlu0 %v1816
        %v1818 = vpop.xlane.xlu0 %1817
        %v1819 = vsel %vm866, %v1809, 0.0
        %1820 = vadd.xlane.f32.xlu0 %v1819
        %v1821 = vpop.xlane.xlu0 %1820
        %v1822 = vmul.f32 %v1812, %v885
        %v1823 = vmul.f32 %v1815, %v885
        %v1824 = vmul.f32 %v1818, %v885
        %v1825 = vmul.f32 %v1821, %v885
        %v1826 = vadd.f32 %v1822, 1e-05
        %v1827 = vadd.f32 %v1823, 1e-05
        %v1828 = vadd.f32 %v1824, 1e-05
        %v1829 = vadd.f32 %v1825, 1e-05
        %v1830 = vrsqrt.pop %v1826
        %v1831 = vmul.f32 %v1830, %v1826
        %v1832 = vmul.f32 %v1831, %v1830
        %v1833 = vmul.f32 0.5, %v1832
        %v1834 = vsub.f32 1.5, %v1833
        %v1835 = vmul.f32 %v1830, %v1834
        %vm1836 = vweird.f32 %v1826
        %vm1837 = vweird.f32 %v1830
        %vm1838 = vmor %vm1836, %vm1837
        %v1839 = vsel %vm1838, %v1830, %v1835
        %v1840 = vrsqrt.pop %v1827
        %v1841 = vmul.f32 %v1840, %v1827
        %v1842 = vmul.f32 %v1841, %v1840
        %v1843 = vmul.f32 0.5, %v1842
        %v1844 = vsub.f32 1.5, %v1843
        %v1845 = vmul.f32 %v1840, %v1844
        %vm1846 = vweird.f32 %v1827
        %vm1847 = vweird.f32 %v1840
        %vm1848 = vmor %vm1846, %vm1847
        %v1849 = vsel %vm1848, %v1840, %v1845
        %v1850 = vrsqrt.pop %v1828
        %v1851 = vmul.f32 %v1850, %v1828
        %v1852 = vmul.f32 %v1851, %v1850
        %v1853 = vmul.f32 0.5, %v1852
        %v1854 = vsub.f32 1.5, %v1853
        %v1855 = vmul.f32 %v1850, %v1854
        %vm1856 = vweird.f32 %v1828
        %vm1857 = vweird.f32 %v1850
        %vm1858 = vmor %vm1856, %vm1857
        %v1859 = vsel %vm1858, %v1850, %v1855
        %v1860 = vrsqrt.pop %v1829
        %v1861 = vmul.f32 %v1860, %v1829
        %v1862 = vmul.f32 %v1861, %v1860
        %v1863 = vmul.f32 0.5, %v1862
        %v1864 = vsub.f32 1.5, %v1863
        %v1865 = vmul.f32 %v1860, %v1864
        %vm1866 = vweird.f32 %v1829
        %vm1867 = vweird.f32 %v1860
        %vm1868 = vmor %vm1866, %vm1867
        %v1869 = vsel %vm1868, %v1860, %v1865
        %v1870 = vmul.f32 %v1802, %v1839
        %v1871 = vmul.f32 %v1803, %v1849
        %v1872 = vmul.f32 %v1804, %v1859
        %v1873 = vmul.f32 %v1805, %v1869
        %v1875 = vperm.slane %v1784, 0
        %v1877 = vmul.f32 %v1870, %v1875
        %v1878 = vmul.f32 %v1871, %v1875
        %v1879 = vmul.f32 %v1872, %v1875
        %v1880 = vmul.f32 %v1873, %v1875
        %v1882 = vperm.slane %v1785, 0
        %v1884 = vadd.f32 %v1877, %v1882
        %v1885 = vadd.f32 %v1878, %v1882
        %v1886 = vadd.f32 %v1879, %v1882
        %v1887 = vadd.f32 %v1880, %v1882
        %v1888 = vpack.c.bf16 %v1885, %v1884
        %v1889 = vpack.c.bf16 %v1887, %v1886
        %v1890 = vld [vmem:[%s839] sm:$0xf]
        %v1891 = vld [vmem:[%s839 + $0x4] sm:$0xf]
        %v1892 = vld [vmem:[%s839 + $0x8] sm:$0xf]
        %v1893 = vld [vmem:[%s839 + $0xc] sm:$0xf]
        %v1894 = vld [vmem:[%s696] sm:$0x1]
        %v1896 = vperm.slane %v1894, 0
        %v1902 = vunpack.c.l.b16 %v1890
        %v1903 = vunpack.c.l.b16 %v1891
        %v1904 = vunpack.c.l.b16 %v1892
        %v1905 = vunpack.c.l.b16 %v1893
        %v1906 = vpack.c.b16 %v1903, %v1902
        %v1907 = vpack.c.b16 %v1905, %v1904
        %v1911 = vsel %vm866, %v1888, 0
        %v1914 = vsel %vm866, %v1889, 0
        %1916 = vmatpush.bf16.msra.mxu0 0
        %1917 = vmatpush.bf16.msra.mxu0 0
        %1918 = vmatpush.bf16.msra.mxu0 0
        %1919 = vmatpush.bf16.msra.mxu0 0
        %1920 = vmatpush.bf16.msra.mxu0 0
        %1921 = vmatpush.bf16.msra.mxu0 0
        %1922 = vmatpush.bf16.msra.mxu0 %v1907
        %1923 = vmatpush.bf16.msra.mxu0 %v1906
        %1924 = vmatmul.bf16.gmra.mxu0 %v1911
        %v1925 = vpop.f32.mrf.mxu0
        %v1926 = vadd.f32 %v1896, %v1925
        %v1927 = vpop.f32.mrf.mxu0
        %v1928 = vadd.f32 %v1896, %v1927
        %1929 = vmatmul.bf16.gmra.mxu0 %v1914
        %v1930 = vpop.f32.mrf.mxu0
        %v1931 = vadd.f32 %v1896, %v1930
        %v1932 = vpop.f32.mrf.mxu0
        %v1933 = vadd.f32 %v1896, %v1932
        %1934 = vdwg.mxu0
        %v1935 = vmul.f32 %v1926, 0.5
        %v1936 = vmul.f32 %v1928, 0.5
        %v1937 = vmul.f32 %v1931, 0.5
        %v1938 = vmul.f32 %v1933, 0.5
        %v1939 = vmul.f32 %v1926, 0.044715
        %v1940 = vmul.f32 %v1928, 0.044715
        %v1941 = vmul.f32 %v1931, 0.044715
        %v1942 = vmul.f32 %v1933, 0.044715
        %v1943 = vmul.f32 %v1939, %v1926
        %v1944 = vmul.f32 %v1940, %v1928
        %v1945 = vmul.f32 %v1941, %v1931
        %v1946 = vmul.f32 %v1942, %v1933
        %v1947 = vmul.f32 %v1943, %v1926
        %v1948 = vmul.f32 %v1944, %v1928
        %v1949 = vmul.f32 %v1945, %v1931
        %v1950 = vmul.f32 %v1946, %v1933
        %v1951 = vadd.f32 %v1926, %v1947
        %v1952 = vadd.f32 %v1928, %v1948
        %v1953 = vadd.f32 %v1931, %v1949
        %v1954 = vadd.f32 %v1933, %v1950
        %v1955 = vmul.f32 %v1951, 0.7978846
        %v1956 = vmul.f32 %v1952, 0.7978846
        %v1957 = vmul.f32 %v1953, 0.7978846
        %v1958 = vmul.f32 %v1954, 0.7978846
        %v1959 = vtanh.pop %v1955
        %v1960 = vtanh.pop %v1956
        %v1961 = vtanh.pop %v1957
        %v1962 = vtanh.pop %v1958
        %v1963 = vadd.f32 %v1959, 1.0
        %v1964 = vadd.f32 %v1960, 1.0
        %v1965 = vadd.f32 %v1961, 1.0
        %v1966 = vadd.f32 %v1962, 1.0
        %v1967 = vmul.f32 %v1935, %v1963
        %v1968 = vmul.f32 %v1936, %v1964
        %v1969 = vmul.f32 %v1937, %v1965
        %v1970 = vmul.f32 %v1938, %v1966
        %v1971 = vpack.c.bf16 %v1968, %v1967
        %v1972 = vpack.c.bf16 %v1970, %v1969
        %v1973 = vld [vmem:[%s844] sm:$0xf]
        %v1974 = vld [vmem:[%s844 + $0x4] sm:$0xf]
        %v1975 = vld [vmem:[%s844 + $0x8] sm:$0xf]
        %v1976 = vld [vmem:[%s844 + $0xc] sm:$0xf]
        %v1977 = vld [vmem:[%s844 + $0x10] sm:$0xf]
        %v1978 = vld [vmem:[%s844 + $0x14] sm:$0xf]
        %v1979 = vld [vmem:[%s844 + $0x18] sm:$0xf]
        %v1980 = vld [vmem:[%s844 + $0x1c] sm:$0xf]
        %v1981 = vld [vmem:[%s844 + $0x20] sm:$0xf]
        %v1982 = vld [vmem:[%s844 + $0x24] sm:$0xf]
        %v1983 = vld [vmem:[%s844 + $0x28] sm:$0xf]
        %v1984 = vld [vmem:[%s844 + $0x2c] sm:$0xf]
        %v1985 = vld [vmem:[%s844 + $0x30] sm:$0xf]
        %v1986 = vld [vmem:[%s844 + $0x34] sm:$0xf]
        %v1987 = vld [vmem:[%s844 + $0x38] sm:$0xf]
        %v1988 = vld [vmem:[%s844 + $0x3c] sm:$0xf]
        %v1989 = vld [vmem:[%s705] sm:$0x1]
        %v1991 = vperm.slane %v1989, 0
        %v2009 = vunpack.c.l.b16 %v1973
        %v2010 = vunpack.c.l.b16 %v1974
        %v2011 = vunpack.c.l.b16 %v1975
        %v2012 = vunpack.c.l.b16 %v1976
        %v2013 = vunpack.c.l.b16 %v1977
        %v2014 = vunpack.c.l.b16 %v1978
        %v2015 = vunpack.c.l.b16 %v1979
        %v2016 = vunpack.c.l.b16 %v1980
        %v2017 = vunpack.c.l.b16 %v1981
        %v2018 = vunpack.c.l.b16 %v1982
        %v2019 = vunpack.c.l.b16 %v1983
        %v2020 = vunpack.c.l.b16 %v1984
        %v2021 = vunpack.c.l.b16 %v1985
        %v2022 = vunpack.c.l.b16 %v1986
        %v2023 = vunpack.c.l.b16 %v1987
        %v2024 = vunpack.c.l.b16 %v1988
        %v2025 = vpack.c.b16 %v2010, %v2009
        %v2026 = vpack.c.b16 %v2012, %v2011
        %v2027 = vpack.c.b16 %v2014, %v2013
        %v2028 = vpack.c.b16 %v2016, %v2015
        %v2029 = vpack.c.b16 %v2018, %v2017
        %v2030 = vpack.c.b16 %v2020, %v2019
        %v2031 = vpack.c.b16 %v2022, %v2021
        %v2032 = vpack.c.b16 %v2024, %v2023
        %2041 = vmatpush.bf16.msra.mxu0 %v2032
        %2042 = vmatpush.bf16.msra.mxu0 %v2031
        %2043 = vmatpush.bf16.msra.mxu0 %v2030
        %2044 = vmatpush.bf16.msra.mxu0 %v2029
        %2045 = vmatpush.bf16.msra.mxu0 %v2028
        %2046 = vmatpush.bf16.msra.mxu0 %v2027
        %2047 = vmatpush.bf16.msra.mxu0 %v2026
        %2048 = vmatpush.bf16.msra.mxu0 %v2025
        %2049 = vmatmul.bf16.gmra.mxu0 %v1971
        %v2050 = vpop.f32.mrf.mxu0
        %v2051 = vadd.f32 %v1991, %v2050
        %v2052 = vpop.f32.mrf.mxu0
        %v2053 = vadd.f32 %v1991, %v2052
        %2054 = vmatmul.bf16.gmra.mxu0 %v1972
        %v2055 = vpop.f32.mrf.mxu0
        %v2056 = vadd.f32 %v1991, %v2055
        %v2057 = vpop.f32.mrf.mxu0
        %v2058 = vadd.f32 %v1991, %v2057
        %2059 = vdwg.mxu0
        %v2060 = vadd.f32 %v1780, %v2051
        %v2061 = vadd.f32 %v1781, %v2053
        %v2062 = vadd.f32 %v1782, %v2056
        %v2063 = vadd.f32 %v1783, %v2058
        %2064 = vst.msk [vmem:[#allocation2] sm:$0xff] %vm866, %v2060
        %2065 = vst.msk [vmem:[#allocation2 + $0x8] sm:$0xff] %vm866, %v2061
        %2066 = vst.msk [vmem:[#allocation2 + $0x10] sm:$0xff] %vm866, %v2062
        %2067 = vst.msk [vmem:[#allocation2 + $0x18] sm:$0xff] %vm866, %v2063
        %p2068 = scmp.eq.s32.totalorder %s45, 1
        // Predicated region
        $region117: #{vit_decoder_forward.1} parent=83 // pred_check
          %p2069 = pneg %p2068
        $region118: #{vit_decoder_forward.1} parent=83 // pred_check_branch
          %2071 = sbr.rel (%p2069) target = $region120
        $region119: #{vit_decoder_forward.1} parent=83 // pred_region
          %v2072 = vld [vmem:[%s12] sm:$0x1]
          %v2073 = vld [vmem:[%s13] sm:$0x1]
          %v2074 = vsel %vm866, %v2061, 0.0
          %2075 = vadd.xlane.f32.xlu0 %v2074
          %v2076 = vpop.xlane.xlu0 %2075
          %v2077 = vsel %vm866, %v2063, 0.0
          %2078 = vadd.xlane.f32.xlu0 %v2077
          %v2079 = vpop.xlane.xlu0 %2078
          %v2080 = vmul.f32 %v2076, %v885
          %v2081 = vmul.f32 %v2079, %v885
          %v2082 = vsub.f32 %v2061, %v2080
          %v2083 = vsub.f32 %v2063, %v2081
          %v2084 = vmul.f32 %v2082, %v2082
          %v2085 = vmul.f32 %v2083, %v2083
          %v2086 = vsel %vm866, %v2084, 0.0
          %2087 = vadd.xlane.f32.xlu0 %v2086
          %v2088 = vpop.xlane.xlu0 %2087
          %v2089 = vsel %vm866, %v2085, 0.0
          %2090 = vadd.xlane.f32.xlu0 %v2089
          %v2091 = vpop.xlane.xlu0 %2090
          %v2092 = vmul.f32 %v2088, %v885
          %v2093 = vmul.f32 %v2091, %v885
          %v2094 = vadd.f32 %v2092, 1e-05
          %v2095 = vadd.f32 %v2093, 1e-05
          %v2096 = vrsqrt.pop %v2094
          %v2097 = vmul.f32 %v2096, %v2094
          %v2098 = vmul.f32 %v2097, %v2096
          %v2099 = vmul.f32 0.5, %v2098
          %v2100 = vsub.f32 1.5, %v2099
          %v2101 = vmul.f32 %v2096, %v2100
          %vm2102 = vweird.f32 %v2094
          %vm2103 = vweird.f32 %v2096
          %vm2104 = vmor %vm2102, %vm2103
          %v2105 = vsel %vm2104, %v2096, %v2101
          %v2106 = vrsqrt.pop %v2095
          %v2107 = vmul.f32 %v2106, %v2095
          %v2108 = vmul.f32 %v2107, %v2106
          %v2109 = vmul.f32 0.5, %v2108
          %v2110 = vsub.f32 1.5, %v2109
          %v2111 = vmul.f32 %v2106, %v2110
          %vm2112 = vweird.f32 %v2095
          %vm2113 = vweird.f32 %v2106
          %vm2114 = vmor %vm2112, %vm2113
          %v2115 = vsel %vm2114, %v2106, %v2111
          %v2116 = vmul.f32 %v2082, %v2105
          %v2117 = vmul.f32 %v2083, %v2115
          %v2119 = vperm.slane %v2072, 0
          %v2121 = vmul.f32 %v2116, %v2119
          %v2122 = vmul.f32 %v2117, %v2119
          %v2124 = vperm.slane %v2073, 0
          %v2126 = vadd.f32 %v2121, %v2124
          %v2127 = vadd.f32 %v2122, %v2124
          %v2128 = vpack.c.bf16 %v2127, %v2126
          %v2129 = vld [vmem:[#allocation13] sm:$0xf]
          %v2130 = vld [vmem:[#allocation13 + $0x4] sm:$0xf]
          %v2131 = vld [vmem:[#allocation13 + $0x8] sm:$0xf]
          %v2132 = vld [vmem:[#allocation13 + $0xc] sm:$0xf]
          %v2133 = vld [vmem:[#allocation15] sm:$0x1]
          %v2135 = vperm.slane %v2133, 0
          %v2141 = vunpack.c.l.b16 %v2129
          %v2142 = vunpack.c.l.b16 %v2130
          %v2143 = vunpack.c.l.b16 %v2131
          %v2144 = vunpack.c.l.b16 %v2132
          %v2145 = vpack.c.b16 %v2142, %v2141
          %v2146 = vpack.c.b16 %v2144, %v2143
          %v2150 = vsel %vm866, %v2128, 0
          %2152 = vmatpush.bf16.msra.mxu0 0
          %2153 = vmatpush.bf16.msra.mxu0 0
          %2154 = vmatpush.bf16.msra.mxu0 0
          %2155 = vmatpush.bf16.msra.mxu0 0
          %2156 = vmatpush.bf16.msra.mxu0 0
          %2157 = vmatpush.bf16.msra.mxu0 0
          %2158 = vmatpush.bf16.msra.mxu0 %v2146
          %2159 = vmatpush.bf16.msra.mxu0 %v2145
          %2160 = vmatmul.bf16.gmra.mxu0 %v2150
          %v2161 = vpop.f32.mrf.mxu0
          %v2162 = vadd.f32 %v2135, %v2161
          %v2163 = vpop.f32.mrf.mxu0
          %v2164 = vadd.f32 %v2135, %v2163
          %2165 = vdwg.mxu0
          %2166 = vst [vmem:[%s811] sm:$0xff] %v2162
          %2167 = vst [vmem:[%s811 + $0x8] sm:$0xff] %v2164
        $region120: #{vit_decoder_forward.1} parent=83 // pred_fallthru
          _
        %s2168 = sand.u32 %s456, 1
        %s2169 = scalar_lea.sflag [#allocation6], %s2168
        %s2170 = sand.u32 %s456, 1
        %s2171 = smul.addr %s2170, 16
        %s2172 = scalar_lea.vmem [#allocation16], %s2171
        // Predicated region
        $region121: #{vit_decoder_forward.1} parent=83 // pred_check
          %p2173 = pneg %p466
        $region122: #{vit_decoder_forward.1} parent=83 // pred_check_branch
          %2175 = sbr.rel (%p2173) target = $region124
        $region123: #{vit_decoder_forward.1} parent=83 // pred_region
          %s2176 = smul.u32 2, %s44
          %2178 = vsyncadd %s2169, 0
          %s2179 = smul.addr %s2176, 8
          %s2180 = scalar_lea.hbm %s16, %s2179
          %s2181 = sshll.u32 %s2172, 4
          %s2182 = int_to_ptr.vmem [resolvable:$true] %s2181
          %s2183 = sshll.u32 %s2180, 4
          %s2184 = int_to_ptr.hbm [resolvable:$true] %s2183
          %2189 = dma.vmem_to_hbm [thread:$0]  %s2182, 256, %s2184, %s2169, 128, 128, 8
        $region124: #{vit_decoder_forward.1} parent=83 // pred_fallthru
          _
      $region84: #{vit_decoder_forward.1} parent=5 // pred_fallthru
        _
      %p2190 = scmp.le.s32.totalorder 2, %s35
      // Predicated region
      $region125: #{vit_decoder_forward.1} parent=5 // pred_check
        %p2191 = pneg %p2190
      $region126: #{vit_decoder_forward.1} parent=5 // pred_check_branch
        %2193 = sbr.rel (%p2191) target = $region128
      $region127: #{vit_decoder_forward.1} parent=5 // pred_region
        %s2194 = ssub.s32 %s35, 2
        // Predicated region
        $region129: #{vit_decoder_forward.1} parent=127 // pred_check
          %p2195 = pneg %p472
        $region130: #{vit_decoder_forward.1} parent=127 // pred_check_branch
          %2197 = sbr.rel (%p2195) target = $region132
        $region131: #{vit_decoder_forward.1} parent=127 // pred_region
          %s2198 = sand.u32 %s457, 1
          %s2199 = scalar_lea.sflag [#allocation6], %s2198
          %s2200 = sand.u32 %s457, 1
          %s2201 = smul.addr %s2200, 16
          %s2202 = scalar_lea.vmem [#allocation16], %s2201
          %2204 = dma.done %s2199, 256
        $region132: #{vit_decoder_forward.1} parent=127 // pred_fallthru
          _
      $region128: #{vit_decoder_forward.1} parent=5 // pred_fallthru
        _
    $region6: #{vit_decoder_forward.1} parent=1 // loop_footer
      %s39 = sadd.s32 1, %s35
    $region7: #{vit_decoder_forward.1} parent=1 // loop_footer_branch
      %34 = sbr.rel target = $region3
    $region8: #{vit_decoder_forward.1} parent=1 // loop_exit
      _
    %2205 = vsyncpa [#allocation5], 1
    %s2206 = scalar_lea.sflag [#allocation5], 1
    %2207 = vsyncpa %s2206, 1
    %2208 = vsyncpa [#allocation8], 1
    %s2209 = scalar_lea.sflag [#allocation8], 1
    %2210 = vsyncpa %s2209, 1
    %2211 = vsyncpa [#allocation11], 1
    %s2212 = scalar_lea.sflag [#allocation11], 1
    %2213 = vsyncpa %s2212, 1
    %2214 = vsyncpa [#allocation14], 1
    %2215 = vsyncpa [#allocation6], 1
    %s2216 = scalar_lea.sflag [#allocation6], 1
    %2217 = vsyncpa %s2216, 1

</llo_original>
